<compile_context>
chip_gen: v5e
topology: v5e:2x2
jax: 0.10.0
libtpu: 0.0.40
codegen_flags: <defaults>
</compile_context>

<pallas_src>
import jax
import jax.numpy as jnp
from jax.experimental import pallas as pl
from jax.experimental.pallas import tpu as pltpu


def _mlp_kernel(x_ref,
                w0_ref, b0_ref,
                w1_ref, b1_ref,
                w2_ref, b2_ref,
                w3_ref, b3_ref,
                o_ref):
    """Fused 4-layer MLP on one tile of rows. All weights live fully in VMEM.

    x / w* are bf16 (MXU-native); accumulation, bias add and ReLU run in f32.
    """
    x = x_ref[...]  # bf16 (tile_n, in_dim)

    # layer 0: in_dim -> hidden, ReLU
    h = jnp.dot(x, w0_ref[...], preferred_element_type=jnp.float32) + b0_ref[...]
    h = jnp.maximum(h, 0.0).astype(jnp.bfloat16)

    # layer 1: hidden -> hidden, ReLU
    h = jnp.dot(h, w1_ref[...], preferred_element_type=jnp.float32) + b1_ref[...]
    h = jnp.maximum(h, 0.0).astype(jnp.bfloat16)

    # layer 2: hidden -> hidden, ReLU
    h = jnp.dot(h, w2_ref[...], preferred_element_type=jnp.float32) + b2_ref[...]
    h = jnp.maximum(h, 0.0).astype(jnp.bfloat16)

    # output layer: hidden -> out_dim, no activation (f32 result)
    out = jnp.dot(h, w3_ref[...], preferred_element_type=jnp.float32) + b3_ref[...]
    o_ref[...] = out.astype(o_ref.dtype)


def feature_field_forward(x, params, *, tile_n=512, dot_dtype=jnp.bfloat16):
    """x: (N, in_dim) float32. params: dict of weights/biases. Returns (N, out_dim) f32.

    Weights are stored as (in_features, out_features) -- the transpose of PyTorch's
    nn.Linear weight -- so the kernel computes h = x @ W + b directly on the MXU.
    """
    N, in_dim = x.shape
    w0, b0 = params["w0"], params["b0"]
    w1, b1 = params["w1"], params["b1"]
    w2, b2 = params["w2"], params["b2"]
    w3, b3 = params["w3"], params["b3"]
    out_dim = w3.shape[1]

    assert tile_n % 8 == 0, "tile_n must be a multiple of 8 (sublane granularity)"

    # Zero-pad the batch to a tile boundary so big tiles never push padding onto
    # callers. Padding rows produce finite values that we slice away below.
    pad = (-N) % tile_n
    if pad:
        x = jnp.pad(x, ((0, pad), (0, 0)))
    n_padded = N + pad
    grid = (n_padded // tile_n,)

    # Cast MXU operands to bf16; biases stay f32 (added to the f32 accumulator).
    x_c = x.astype(dot_dtype)
    w0c, w1c, w2c, w3c = (w.astype(dot_dtype) for w in (w0, w1, w2, w3))
    b0f, b1f, b2f, b3f = (b.astype(jnp.float32) for b in (b0, b1, b2, b3))

    # Weights / biases: full-array blocks with a constant block index -> they are
    # fetched once and stay resident in VMEM across all grid steps.
    def resident(shape):
        return pl.BlockSpec(shape, lambda i: (0,) * len(shape))

    out = pl.pallas_call(
        _mlp_kernel,
        out_shape=jax.ShapeDtypeStruct((n_padded, out_dim), jnp.float32),
        grid_spec=pltpu.PrefetchScalarGridSpec(
            num_scalar_prefetch=0,
            grid=grid,
            in_specs=[
                pl.BlockSpec((tile_n, in_dim), lambda i: (i, 0)),  # x tile
                resident(w0c.shape), resident(b0f.shape),
                resident(w1c.shape), resident(b1f.shape),
                resident(w2c.shape), resident(b2f.shape),
                resident(w3c.shape), resident(b3f.shape),
            ],
            out_specs=pl.BlockSpec((tile_n, out_dim), lambda i: (i, 0)),
        ),
        compiler_params=pltpu.CompilerParams(
            dimension_semantics=("parallel",),
            vmem_limit_bytes=64 << 20,  # headroom for tile_n up to ~2048
        ),
    )(x_c, w0c, b0f, w1c, b1f, w2c, b2f, w3c, b3f)

    if pad:
        out = out[:N]
    return out


def init_params(key, in_dim=30, hidden_dim=128, out_dim=384, num_layers=3):
    """Deterministic synthetic init (Kaiming-uniform-like, matching nn.Linear shapes)."""
    dims = [(in_dim, hidden_dim)]
    for _ in range(num_layers - 1):
        dims.append((hidden_dim, hidden_dim))
    dims.append((hidden_dim, out_dim))

    params = {}
    keys = jax.random.split(key, 2 * len(dims))
    for idx, (fan_in, fan_out) in enumerate(dims):
        bound = 1.0 / jnp.sqrt(jnp.float32(fan_in))
        w = jax.random.uniform(keys[2 * idx], (fan_in, fan_out),
                               minval=-bound, maxval=bound, dtype=jnp.float32)
        b = jax.random.uniform(keys[2 * idx + 1], (1, fan_out),
                               minval=-bound, maxval=bound, dtype=jnp.float32)
        params[f"w{idx}"] = w
        params[f"b{idx}"] = b
    return params


def reference_forward(x, params):
    """Pure-JAX f32 reference of the same MLP (for correctness check)."""
    h = jnp.maximum(x @ params["w0"] + params["b0"], 0.0)
    h = jnp.maximum(h @ params["w1"] + params["b1"], 0.0)
    h = jnp.maximum(h @ params["w2"] + params["b2"], 0.0)
    return h @ params["w3"] + params["b3"]


if __name__ == "__main__":
    key = jax.random.PRNGKey(0)
    k_param, k_x = jax.random.split(key)

    in_dim, hidden_dim, out_dim, num_layers = 30, 128, 384, 3
    # Non-multiple batch exercises the zero-padding path; tile_n=256 -> grid=4
    # (keeps both v7x TensorCores busy even at this small demo size).
    N = 1000
    tile_n = 256

    params = init_params(k_param, in_dim=in_dim, hidden_dim=hidden_dim,
                         out_dim=out_dim, num_layers=num_layers)
    x = jax.random.normal(k_x, (N, in_dim), dtype=jnp.float32)

    out = feature_field_forward(x, params, tile_n=tile_n)
    out = jax.block_until_ready(out)

    assert out.shape == (N, out_dim)

    # Mirror of the module's NaN assertion.
    assert not bool(jnp.any(jnp.isnan(out))), "NaN in FeatureField output"

    # Correctness vs pure-JAX f32 reference (bf16 matmul inputs -> relative tolerance).
    ref = reference_forward(x, params)
    err = float(jnp.max(jnp.abs(out - ref)))
    scale = float(jnp.max(jnp.abs(ref)))
    assert err <= 2e-2 * scale + 1e-3, f"mismatch vs reference: abs_err={err}, scale={scale}"

    print("KERNEL_OK")
</pallas_src>

<mosaic_0001>
module attributes {stable_mosaic.version = 11 : i64} {
  func.func @_mlp_kernel(%arg0: i32, %arg1: memref<256x30xbf16, #tpu.memory_space<vmem>>, %arg2: memref<30x128xbf16, #tpu.memory_space<vmem>>, %arg3: memref<1x128xf32, #tpu.memory_space<vmem>>, %arg4: memref<128x128xbf16, #tpu.memory_space<vmem>>, %arg5: memref<1x128xf32, #tpu.memory_space<vmem>>, %arg6: memref<128x128xbf16, #tpu.memory_space<vmem>>, %arg7: memref<1x128xf32, #tpu.memory_space<vmem>>, %arg8: memref<128x384xbf16, #tpu.memory_space<vmem>>, %arg9: memref<1x384xf32, #tpu.memory_space<vmem>>, %arg10: memref<256x384xf32, #tpu.memory_space<vmem>>) attributes {dimension_semantics = [#tpu.dimension_semantics<parallel>], iteration_bounds = array<i64: 4>, scalar_prefetch = 0 : i64, scratch_operands = 0 : i64, tpu.core_type = #tpu.core_type<tc>, window_params = [{transform_indices = @transform_0, window_bounds = array<i64: 256, 30>}, {pipeline_mode = #tpu.pipeline_mode<synchronous>, transform_indices = @transform_1, window_bounds = array<i64: 30, 128>}, {pipeline_mode = #tpu.pipeline_mode<synchronous>, transform_indices = @transform_2, window_bounds = array<i64: 1, 128>}, {pipeline_mode = #tpu.pipeline_mode<synchronous>, transform_indices = @transform_3, window_bounds = array<i64: 128, 128>}, {pipeline_mode = #tpu.pipeline_mode<synchronous>, transform_indices = @transform_4, window_bounds = array<i64: 1, 128>}, {pipeline_mode = #tpu.pipeline_mode<synchronous>, transform_indices = @transform_5, window_bounds = array<i64: 128, 128>}, {pipeline_mode = #tpu.pipeline_mode<synchronous>, transform_indices = @transform_6, window_bounds = array<i64: 1, 128>}, {pipeline_mode = #tpu.pipeline_mode<synchronous>, transform_indices = @transform_7, window_bounds = array<i64: 128, 384>}, {pipeline_mode = #tpu.pipeline_mode<synchronous>, transform_indices = @transform_8, window_bounds = array<i64: 1, 384>}, {transform_indices = @transform_9, window_bounds = array<i64: 256, 384>}]} {
    %c0 = arith.constant 0 : index
    %c0_0 = arith.constant 0 : index
    %0 = vector.load %arg1[%c0, %c0_0] : memref<256x30xbf16, #tpu.memory_space<vmem>>, vector<256x30xbf16>
    %c0_1 = arith.constant 0 : index
    %c0_2 = arith.constant 0 : index
    %1 = vector.load %arg2[%c0_1, %c0_2] : memref<30x128xbf16, #tpu.memory_space<vmem>>, vector<30x128xbf16>
    %cst = arith.constant dense<0.000000e+00> : vector<256x128xf32>
    %2 = tpu.matmul %0, %1, %cst {dimension_numbers = #tpu.dot_dimension_numbers<[1], [0], [0], [1], [0, 0, 1, 1], [], []>} : vector<256x30xbf16>, vector<30x128xbf16>, vector<256x128xf32> -> vector<256x128xf32>
    %c0_3 = arith.constant 0 : index
    %c0_4 = arith.constant 0 : index
    %3 = vector.load %arg3[%c0_3, %c0_4] : memref<1x128xf32, #tpu.memory_space<vmem>>, vector<1x128xf32>
    %4 = vector.broadcast %3 : vector<1x128xf32> to vector<256x128xf32>
    %5 = arith.addf %2, %4 : vector<256x128xf32>
    %cst_5 = arith.constant 0.000000e+00 : f32
    %6 = vector.broadcast %cst_5 : f32 to vector<256x128xf32>
    %7 = arith.maximumf %5, %6 : vector<256x128xf32>
    %8 = arith.truncf %7 : vector<256x128xf32> to vector<256x128xbf16>
    %c0_6 = arith.constant 0 : index
    %c0_7 = arith.constant 0 : index
    %9 = vector.load %arg4[%c0_6, %c0_7] : memref<128x128xbf16, #tpu.memory_space<vmem>>, vector<128x128xbf16>
    %cst_8 = arith.constant dense<0.000000e+00> : vector<256x128xf32>
    %10 = tpu.matmul %8, %9, %cst_8 {dimension_numbers = #tpu.dot_dimension_numbers<[1], [0], [0], [1], [0, 0, 1, 1], [], []>} : vector<256x128xbf16>, vector<128x128xbf16>, vector<256x128xf32> -> vector<256x128xf32>
    %c0_9 = arith.constant 0 : index
    %c0_10 = arith.constant 0 : index
    %11 = vector.load %arg5[%c0_9, %c0_10] : memref<1x128xf32, #tpu.memory_space<vmem>>, vector<1x128xf32>
    %12 = vector.broadcast %11 : vector<1x128xf32> to vector<256x128xf32>
    %13 = arith.addf %10, %12 : vector<256x128xf32>
    %cst_11 = arith.constant 0.000000e+00 : f32
    %14 = vector.broadcast %cst_11 : f32 to vector<256x128xf32>
    %15 = arith.maximumf %13, %14 : vector<256x128xf32>
    %16 = arith.truncf %15 : vector<256x128xf32> to vector<256x128xbf16>
    %c0_12 = arith.constant 0 : index
    %c0_13 = arith.constant 0 : index
    %17 = vector.load %arg6[%c0_12, %c0_13] : memref<128x128xbf16, #tpu.memory_space<vmem>>, vector<128x128xbf16>
    %cst_14 = arith.constant dense<0.000000e+00> : vector<256x128xf32>
    %18 = tpu.matmul %16, %17, %cst_14 {dimension_numbers = #tpu.dot_dimension_numbers<[1], [0], [0], [1], [0, 0, 1, 1], [], []>} : vector<256x128xbf16>, vector<128x128xbf16>, vector<256x128xf32> -> vector<256x128xf32>
    %c0_15 = arith.constant 0 : index
    %c0_16 = arith.constant 0 : index
    %19 = vector.load %arg7[%c0_15, %c0_16] : memref<1x128xf32, #tpu.memory_space<vmem>>, vector<1x128xf32>
    %20 = vector.broadcast %19 : vector<1x128xf32> to vector<256x128xf32>
    %21 = arith.addf %18, %20 : vector<256x128xf32>
    %cst_17 = arith.constant 0.000000e+00 : f32
    %22 = vector.broadcast %cst_17 : f32 to vector<256x128xf32>
    %23 = arith.maximumf %21, %22 : vector<256x128xf32>
    %24 = arith.truncf %23 : vector<256x128xf32> to vector<256x128xbf16>
    %c0_18 = arith.constant 0 : index
    %c0_19 = arith.constant 0 : index
    %25 = vector.load %arg8[%c0_18, %c0_19] : memref<128x384xbf16, #tpu.memory_space<vmem>>, vector<128x384xbf16>
    %cst_20 = arith.constant dense<0.000000e+00> : vector<256x384xf32>
    %26 = tpu.matmul %24, %25, %cst_20 {dimension_numbers = #tpu.dot_dimension_numbers<[1], [0], [0], [1], [0, 0, 1, 1], [], []>} : vector<256x128xbf16>, vector<128x384xbf16>, vector<256x384xf32> -> vector<256x384xf32>
    %c0_21 = arith.constant 0 : index
    %c0_22 = arith.constant 0 : index
    %27 = vector.load %arg9[%c0_21, %c0_22] : memref<1x384xf32, #tpu.memory_space<vmem>>, vector<1x384xf32>
    %28 = vector.broadcast %27 : vector<1x384xf32> to vector<256x384xf32>
    %29 = arith.addf %26, %28 : vector<256x384xf32>
    %c0_23 = arith.constant 0 : index
    %c0_24 = arith.constant 0 : index
    %30 = vector.load %arg10[%c0_23, %c0_24] : memref<256x384xf32, #tpu.memory_space<vmem>>, vector<256x384xf32>
    tpu.vector_store %arg10[%c0_23, %c0_24], %29 {strides = array<i32>} : memref<256x384xf32, #tpu.memory_space<vmem>>, vector<256x384xf32>,
    return
  }
  func.func @transform_0(%arg0: i32) -> (i32, i32) {
    %c0_i32 = arith.constant 0 : i32
    %c0_i32_0 = arith.constant 0 : i32
    return %arg0, %c0_i32 : i32, i32
  }
  func.func @transform_1(%arg0: i32) -> (i32, i32) {
    %c0_i32 = arith.constant 0 : i32
    %c0_i32_0 = arith.constant 0 : i32
    %c0_i32_1 = arith.constant 0 : i32
    return %c0_i32, %c0_i32_0 : i32, i32
  }
  func.func @transform_2(%arg0: i32) -> (i32, i32) {
    %c0_i32 = arith.constant 0 : i32
    %c0_i32_0 = arith.constant 0 : i32
    %c0_i32_1 = arith.constant 0 : i32
    return %c0_i32, %c0_i32_0 : i32, i32
  }
  func.func @transform_3(%arg0: i32) -> (i32, i32) {
    %c0_i32 = arith.constant 0 : i32
    %c0_i32_0 = arith.constant 0 : i32
    %c0_i32_1 = arith.constant 0 : i32
    return %c0_i32, %c0_i32_0 : i32, i32
  }
  func.func @transform_4(%arg0: i32) -> (i32, i32) {
    %c0_i32 = arith.constant 0 : i32
    %c0_i32_0 = arith.constant 0 : i32
    %c0_i32_1 = arith.constant 0 : i32
    return %c0_i32, %c0_i32_0 : i32, i32
  }
  func.func @transform_5(%arg0: i32) -> (i32, i32) {
    %c0_i32 = arith.constant 0 : i32
    %c0_i32_0 = arith.constant 0 : i32
    %c0_i32_1 = arith.constant 0 : i32
    return %c0_i32, %c0_i32_0 : i32, i32
  }
  func.func @transform_6(%arg0: i32) -> (i32, i32) {
    %c0_i32 = arith.constant 0 : i32
    %c0_i32_0 = arith.constant 0 : i32
    %c0_i32_1 = arith.constant 0 : i32
    return %c0_i32, %c0_i32_0 : i32, i32
  }
  func.func @transform_7(%arg0: i32) -> (i32, i32) {
    %c0_i32 = arith.constant 0 : i32
    %c0_i32_0 = arith.constant 0 : i32
    %c0_i32_1 = arith.constant 0 : i32
    return %c0_i32, %c0_i32_0 : i32, i32
  }
  func.func @transform_8(%arg0: i32) -> (i32, i32) {
    %c0_i32 = arith.constant 0 : i32
    %c0_i32_0 = arith.constant 0 : i32
    %c0_i32_1 = arith.constant 0 : i32
    return %c0_i32, %c0_i32_0 : i32, i32
  }
  func.func @transform_9(%arg0: i32) -> (i32, i32) {
    %c0_i32 = arith.constant 0 : i32
    %c0_i32_0 = arith.constant 0 : i32
    return %arg0, %c0_i32 : i32, i32
  }
}

</mosaic_0001>

<llo_original>
// kernel: tpu_custom_call.1
$region0: #{tpu_custom_call.1}
  #allocation0 [shape = 'u32[]', space=smem, size = 0x4, offset = 0x4, fixed_abs, tag = 'smem constant byte address 0x4 - core index']
  #allocation1 [shape = 'u32[72,128]{1,0:T(1,128)}', space=vmem, size = 0x9000, scoped, tag = 'internal scratch']
  %s0 = inlined_call_operand.vmem [shape: bf16[1024,30], index: 0, kind: input, shape index: {}]
  %s1 = inlined_call_operand.hbm [shape: bf16[30,128], index: 1, kind: input, shape index: {}]
  %s2 = inlined_call_operand.hbm [shape: f32[1,128], index: 2, kind: input, shape index: {}]
  %s3 = inlined_call_operand.hbm [shape: bf16[128,128], index: 3, kind: input, shape index: {}]
  %s4 = inlined_call_operand.hbm [shape: f32[1,128], index: 4, kind: input, shape index: {}]
  %s5 = inlined_call_operand.hbm [shape: bf16[128,128], index: 5, kind: input, shape index: {}]
  %s6 = inlined_call_operand.hbm [shape: f32[1,128], index: 6, kind: input, shape index: {}]
  %s7 = inlined_call_operand.hbm [shape: bf16[128,384], index: 7, kind: input, shape index: {}]
  %s8 = inlined_call_operand.hbm [shape: f32[1,384], index: 8, kind: input, shape index: {}]
  %s9 = inlined_call_operand.hbm [shape: f32[1024,384], index: 9, kind: output, shape index: {}]
  %s10 = sld [smem:[#allocation0]]
  $region101: #{tpu_custom_call.1} parent=0
    _
  %s12 = ssub.s32 1, %s10
  %s13 = scalar_select 0, %s12, %s10
  $region1: #{tpu_custom_call.1} parent=0
    #allocation2 [shape = 'u8[8192]{0}', space=vmem, size = 0x2000, scoped, tag = 'input window, operand 1, single buffered']
    #allocation3 [shape = 's32[2]{0}', space=sflag, size = 0x8, scoped, tag = 'scoped memory for tpu_custom_call.1']
    #allocation4 [shape = 's32[2]{0}', space=sflag, size = 0x8, scoped, tag = 'scoped memory for tpu_custom_call.1']
    #allocation5 [shape = 'u8[512]{0}', space=vmem, size = 0x400, scoped, tag = 'input window, operand 2, single buffered']
    #allocation6 [shape = 's32[1]{0}', space=sflag, size = 0x4, scoped, tag = 'scoped memory for tpu_custom_call.1']
    #allocation7 [shape = 'u8[32768]{0}', space=vmem, size = 0x8000, scoped, tag = 'input window, operand 3, single buffered']
    #allocation8 [shape = 'u8[512]{0}', space=vmem, size = 0x400, scoped, tag = 'input window, operand 4, single buffered']
    #allocation9 [shape = 's32[1]{0}', space=sflag, size = 0x4, scoped, tag = 'scoped memory for tpu_custom_call.1']
    #allocation10 [shape = 'u8[32768]{0}', space=vmem, size = 0x8000, scoped, tag = 'input window, operand 5, single buffered']
    #allocation11 [shape = 'u8[512]{0}', space=vmem, size = 0x400, scoped, tag = 'input window, operand 6, single buffered']
    #allocation12 [shape = 's32[1]{0}', space=sflag, size = 0x4, scoped, tag = 'scoped memory for tpu_custom_call.1']
    #allocation13 [shape = 'u8[98304]{0}', space=vmem, size = 0x18000, scoped, tag = 'input window, operand 7, single buffered']
    #allocation14 [shape = 'u8[1536]{0}', space=vmem, size = 0x800, scoped, tag = 'input window, operand 8, single buffered']
    #allocation15 [shape = 's32[1]{0}', space=sflag, size = 0x4, scoped, tag = 'scoped memory for tpu_custom_call.1']
    #allocation16 [shape = 'u8[786432]{0}', space=vmem, size = 0xc0000, scoped, tag = 'output window, operand 0']
    %14 = vsyncpa [#allocation3], 0
    %15 = vsyncpa [#allocation6], 0
    %16 = vsyncpa [#allocation9], 0
    %17 = vsyncpa [#allocation12], 0
    %18 = vsyncpa [#allocation15], 0
    %19 = vsyncpa [#allocation4], 0
    %s20 = scalar_lea.sflag [#allocation4], 1
    %21 = vsyncpa %s20, 0
    loop: start=0, step=1, limit=6
    $region2: #{tpu_custom_call.1} parent=1 // loop_pre_header
      _
    $region3: #{tpu_custom_call.1} parent=1 // loop_header
      %s23 = sphi 0, %s27
      %p24 = scmp.ge.s32.totalorder %s23, 6
      %s33 = sphi 0, %s35
      %s36 = sphi 0, %s33
      %s37 = sphi 0, %s36
      %s53 = sphi 0, %s37
      %s57 = sphi 0, %s57
      %s59 = sphi 0, %s57
      %s60 = sphi 0, %s59
      %s74 = sphi 0, %s60
      %s78 = sphi 0, %s78
      %s80 = sphi 0, %s78
      %s81 = sphi 0, %s80
      %s95 = sphi 0, %s81
      %s99 = sphi 0, %s99
      %s101 = sphi 0, %s99
      %s102 = sphi 0, %s101
      %s116 = sphi 0, %s102
      %s120 = sphi 0, %s120
      %s122 = sphi 0, %s120
      %s123 = sphi 0, %s122
      %s137 = sphi 0, %s123
      %s141 = sphi 0, %s141
      %s143 = sphi 0, %s141
      %s144 = sphi 0, %s143
      %s158 = sphi 0, %s144
      %s162 = sphi 0, %s162
      %s164 = sphi 0, %s162
      %s165 = sphi 0, %s164
      %s179 = sphi 0, %s165
      %s183 = sphi 0, %s183
      %s185 = sphi 0, %s183
      %s186 = sphi 0, %s185
      %s200 = sphi 0, %s186
      %s204 = sphi 0, %s204
      %s206 = sphi 0, %s204
      %s207 = sphi 0, %s206
      %s221 = sphi 0, %s207
      %s227 = sphi 0, %s229
      %s230 = sphi 0, %s227
      %s231 = sphi 0, %s230
      %s247 = sphi 0, %s231
    $region4: #{tpu_custom_call.1} parent=1 // loop_header_branch
      %26 = sbr.rel (%p24) target = $region8
    $region5: #{tpu_custom_call.1} parent=1 // loop_body
      %s28 = ssub.s32 %s23, 1
      %s29 = ssub.s32 %s23, 2
      %s30 = sadd.s32 %s23, 1
      %s31 = ssub.s32 %s23, %s30
      %p32 = scmp.eq.s32.totalorder %s31, 0
      %s34 = sadd.s32 %s33, 1
      %s35 = scalar_select %p32, %s33, %s34
      %p38 = pneg %p32
      %p39 = scmp.eq.s32.totalorder %s23, 3
      %p40 = por %p38, %p39
      %p41 = scmp.ne.s32.totalorder %s33, %s36
      %p42 = scmp.eq.s32.totalorder %s23, 0
      %p43 = por %p41, %p42
      %p44 = scmp.ne.s32.totalorder %s33, %s36
      %p45 = scmp.eq.s32.totalorder %s28, 3
      %p46 = por %p44, %p45
      %p47 = scmp.ne.s32.totalorder %s36, %s37
      %p48 = scmp.eq.s32.totalorder %s28, 0
      %p49 = por %p47, %p48
      %p50 = scmp.ne.s32.totalorder %s36, %s37
      %p51 = scmp.eq.s32.totalorder %s29, 3
      %p52 = por %p50, %p51
      %p54 = scmp.ne.s32.totalorder %s37, %s53
      %p55 = scmp.eq.s32.totalorder %s29, 0
      %p56 = por %p54, %p55
      %s58 = sadd.s32 %s57, 1
      %p61 = scmp.eq.s32.totalorder %s23, 3
      %p62 = scmp.ne.s32.totalorder %s57, %s59
      %p63 = scmp.eq.s32.totalorder %s23, 0
      %p64 = por %p62, %p63
      %p65 = scmp.ne.s32.totalorder %s57, %s59
      %p66 = scmp.eq.s32.totalorder %s28, 3
      %p67 = por %p65, %p66
      %p68 = scmp.ne.s32.totalorder %s59, %s60
      %p69 = scmp.eq.s32.totalorder %s28, 0
      %p70 = por %p68, %p69
      %p71 = scmp.ne.s32.totalorder %s59, %s60
      %p72 = scmp.eq.s32.totalorder %s29, 3
      %p73 = por %p71, %p72
      %p75 = scmp.ne.s32.totalorder %s60, %s74
      %p76 = scmp.eq.s32.totalorder %s29, 0
      %p77 = por %p75, %p76
      %s79 = sadd.s32 %s78, 1
      %p82 = scmp.eq.s32.totalorder %s23, 3
      %p83 = scmp.ne.s32.totalorder %s78, %s80
      %p84 = scmp.eq.s32.totalorder %s23, 0
      %p85 = por %p83, %p84
      %p86 = scmp.ne.s32.totalorder %s78, %s80
      %p87 = scmp.eq.s32.totalorder %s28, 3
      %p88 = por %p86, %p87
      %p89 = scmp.ne.s32.totalorder %s80, %s81
      %p90 = scmp.eq.s32.totalorder %s28, 0
      %p91 = por %p89, %p90
      %p92 = scmp.ne.s32.totalorder %s80, %s81
      %p93 = scmp.eq.s32.totalorder %s29, 3
      %p94 = por %p92, %p93
      %p96 = scmp.ne.s32.totalorder %s81, %s95
      %p97 = scmp.eq.s32.totalorder %s29, 0
      %p98 = por %p96, %p97
      %s100 = sadd.s32 %s99, 1
      %p103 = scmp.eq.s32.totalorder %s23, 3
      %p104 = scmp.ne.s32.totalorder %s99, %s101
      %p105 = scmp.eq.s32.totalorder %s23, 0
      %p106 = por %p104, %p105
      %p107 = scmp.ne.s32.totalorder %s99, %s101
      %p108 = scmp.eq.s32.totalorder %s28, 3
      %p109 = por %p107, %p108
      %p110 = scmp.ne.s32.totalorder %s101, %s102
      %p111 = scmp.eq.s32.totalorder %s28, 0
      %p112 = por %p110, %p111
      %p113 = scmp.ne.s32.totalorder %s101, %s102
      %p114 = scmp.eq.s32.totalorder %s29, 3
      %p115 = por %p113, %p114
      %p117 = scmp.ne.s32.totalorder %s102, %s116
      %p118 = scmp.eq.s32.totalorder %s29, 0
      %p119 = por %p117, %p118
      %s121 = sadd.s32 %s120, 1
      %p124 = scmp.eq.s32.totalorder %s23, 3
      %p125 = scmp.ne.s32.totalorder %s120, %s122
      %p126 = scmp.eq.s32.totalorder %s23, 0
      %p127 = por %p125, %p126
      %p128 = scmp.ne.s32.totalorder %s120, %s122
      %p129 = scmp.eq.s32.totalorder %s28, 3
      %p130 = por %p128, %p129
      %p131 = scmp.ne.s32.totalorder %s122, %s123
      %p132 = scmp.eq.s32.totalorder %s28, 0
      %p133 = por %p131, %p132
      %p134 = scmp.ne.s32.totalorder %s122, %s123
      %p135 = scmp.eq.s32.totalorder %s29, 3
      %p136 = por %p134, %p135
      %p138 = scmp.ne.s32.totalorder %s123, %s137
      %p139 = scmp.eq.s32.totalorder %s29, 0
      %p140 = por %p138, %p139
      %s142 = sadd.s32 %s141, 1
      %p145 = scmp.eq.s32.totalorder %s23, 3
      %p146 = scmp.ne.s32.totalorder %s141, %s143
      %p147 = scmp.eq.s32.totalorder %s23, 0
      %p148 = por %p146, %p147
      %p149 = scmp.ne.s32.totalorder %s141, %s143
      %p150 = scmp.eq.s32.totalorder %s28, 3
      %p151 = por %p149, %p150
      %p152 = scmp.ne.s32.totalorder %s143, %s144
      %p153 = scmp.eq.s32.totalorder %s28, 0
      %p154 = por %p152, %p153
      %p155 = scmp.ne.s32.totalorder %s143, %s144
      %p156 = scmp.eq.s32.totalorder %s29, 3
      %p157 = por %p155, %p156
      %p159 = scmp.ne.s32.totalorder %s144, %s158
      %p160 = scmp.eq.s32.totalorder %s29, 0
      %p161 = por %p159, %p160
      %s163 = sadd.s32 %s162, 1
      %p166 = scmp.eq.s32.totalorder %s23, 3
      %p167 = scmp.ne.s32.totalorder %s162, %s164
      %p168 = scmp.eq.s32.totalorder %s23, 0
      %p169 = por %p167, %p168
      %p170 = scmp.ne.s32.totalorder %s162, %s164
      %p171 = scmp.eq.s32.totalorder %s28, 3
      %p172 = por %p170, %p171
      %p173 = scmp.ne.s32.totalorder %s164, %s165
      %p174 = scmp.eq.s32.totalorder %s28, 0
      %p175 = por %p173, %p174
      %p176 = scmp.ne.s32.totalorder %s164, %s165
      %p177 = scmp.eq.s32.totalorder %s29, 3
      %p178 = por %p176, %p177
      %p180 = scmp.ne.s32.totalorder %s165, %s179
      %p181 = scmp.eq.s32.totalorder %s29, 0
      %p182 = por %p180, %p181
      %s184 = sadd.s32 %s183, 1
      %p187 = scmp.eq.s32.totalorder %s23, 3
      %p188 = scmp.ne.s32.totalorder %s183, %s185
      %p189 = scmp.eq.s32.totalorder %s23, 0
      %p190 = por %p188, %p189
      %p191 = scmp.ne.s32.totalorder %s183, %s185
      %p192 = scmp.eq.s32.totalorder %s28, 3
      %p193 = por %p191, %p192
      %p194 = scmp.ne.s32.totalorder %s185, %s186
      %p195 = scmp.eq.s32.totalorder %s28, 0
      %p196 = por %p194, %p195
      %p197 = scmp.ne.s32.totalorder %s185, %s186
      %p198 = scmp.eq.s32.totalorder %s29, 3
      %p199 = por %p197, %p198
      %p201 = scmp.ne.s32.totalorder %s186, %s200
      %p202 = scmp.eq.s32.totalorder %s29, 0
      %p203 = por %p201, %p202
      %s205 = sadd.s32 %s204, 1
      %p208 = scmp.eq.s32.totalorder %s23, 3
      %p209 = scmp.ne.s32.totalorder %s204, %s206
      %p210 = scmp.eq.s32.totalorder %s23, 0
      %p211 = por %p209, %p210
      %p212 = scmp.ne.s32.totalorder %s204, %s206
      %p213 = scmp.eq.s32.totalorder %s28, 3
      %p214 = por %p212, %p213
      %p215 = scmp.ne.s32.totalorder %s206, %s207
      %p216 = scmp.eq.s32.totalorder %s28, 0
      %p217 = por %p215, %p216
      %p218 = scmp.ne.s32.totalorder %s206, %s207
      %p219 = scmp.eq.s32.totalorder %s29, 3
      %p220 = por %p218, %p219
      %p222 = scmp.ne.s32.totalorder %s207, %s221
      %p223 = scmp.eq.s32.totalorder %s29, 0
      %p224 = por %p222, %p223
      %s225 = ssub.s32 %s23, %s30
      %p226 = scmp.eq.s32.totalorder %s225, 0
      %s228 = sadd.s32 %s227, 1
      %s229 = scalar_select %p226, %s227, %s228
      %p232 = pneg %p226
      %p233 = scmp.eq.s32.totalorder %s23, 3
      %p234 = por %p232, %p233
      %p235 = scmp.ne.s32.totalorder %s227, %s230
      %p236 = scmp.eq.s32.totalorder %s23, 0
      %p237 = por %p235, %p236
      %p238 = scmp.ne.s32.totalorder %s227, %s230
      %p239 = scmp.eq.s32.totalorder %s28, 3
      %p240 = por %p238, %p239
      %p241 = scmp.ne.s32.totalorder %s230, %s231
      %p242 = scmp.eq.s32.totalorder %s28, 0
      %p243 = por %p241, %p242
      %p244 = scmp.ne.s32.totalorder %s230, %s231
      %p245 = scmp.eq.s32.totalorder %s29, 3
      %p246 = por %p244, %p245
      %p248 = scmp.ne.s32.totalorder %s231, %s247
      %p249 = scmp.eq.s32.totalorder %s29, 0
      %p250 = por %p248, %p249
      %p251 = scmp.le.s32.totalorder 1, %s23
      %p252 = scmp.lt.s32.totalorder %s23, 5
      %p253 = pnand %p251, %p252
      %p254 = pneg %p253
      // Predicated region
      $region9: #{tpu_custom_call.1} parent=5 // pred_check
        _
      $region10: #{tpu_custom_call.1} parent=5 // pred_check_branch
        %256 = sbr.rel (%p253) target = $region12
      $region11: #{tpu_custom_call.1} parent=5 // pred_region
        %s257 = ssub.s32 %s23, 1
        // Predicated region
        $region13: #{tpu_custom_call.1} parent=11 // pred_check
          %p258 = pneg %p70
        $region14: #{tpu_custom_call.1} parent=11 // pred_check_branch
          %260 = sbr.rel (%p258) target = $region16
        $region15: #{tpu_custom_call.1} parent=11 // pred_region
          %262 = vsyncadd [#allocation3], 0
          %s263 = sshll.u32 %s1, 4
          %s264 = int_to_ptr.hbm [resolvable:$true] %s263
          %s265 = sshll.u32 [#allocation2], 4
          %s266 = int_to_ptr.vmem [resolvable:$true] %s265
          %271 = dma.hbm_to_vmem [thread:$0]  %s264, 256, %s266, [#allocation3], 64, 64, 4
        $region16: #{tpu_custom_call.1} parent=11 // pred_fallthru
          _
        // Predicated region
        $region17: #{tpu_custom_call.1} parent=11 // pred_check
          %p272 = pneg %p91
        $region18: #{tpu_custom_call.1} parent=11 // pred_check_branch
          %274 = sbr.rel (%p272) target = $region20
        $region19: #{tpu_custom_call.1} parent=11 // pred_region
          %276 = vsyncadd [#allocation6], 0
          %s278 = sshll.u32 %s2, 4
          %s279 = int_to_ptr.hbm [resolvable:$true] %s278
          %s280 = sshll.u32 [#allocation5], 4
          %s281 = int_to_ptr.vmem [resolvable:$true] %s280
          %283 = dma.hbm_to_vmem [thread:$0]  %s279, 16, %s281, [#allocation6]
        $region20: #{tpu_custom_call.1} parent=11 // pred_fallthru
          _
        // Predicated region
        $region21: #{tpu_custom_call.1} parent=11 // pred_check
          %p284 = pneg %p112
        $region22: #{tpu_custom_call.1} parent=11 // pred_check_branch
          %286 = sbr.rel (%p284) target = $region24
        $region23: #{tpu_custom_call.1} parent=11 // pred_region
          %288 = vsyncadd [#allocation6], 0
          %s289 = sshll.u32 %s3, 4
          %s290 = int_to_ptr.hbm [resolvable:$true] %s289
          %s291 = sshll.u32 [#allocation7], 4
          %s292 = int_to_ptr.vmem [resolvable:$true] %s291
          %297 = dma.hbm_to_vmem [thread:$0]  %s290, 1024, %s292, [#allocation6], 64, 64, 4
        $region24: #{tpu_custom_call.1} parent=11 // pred_fallthru
          _
        // Predicated region
        $region25: #{tpu_custom_call.1} parent=11 // pred_check
          %p298 = pneg %p133
        $region26: #{tpu_custom_call.1} parent=11 // pred_check_branch
          %300 = sbr.rel (%p298) target = $region28
        $region27: #{tpu_custom_call.1} parent=11 // pred_region
          %302 = vsyncadd [#allocation9], 0
          %s304 = sshll.u32 %s4, 4
          %s305 = int_to_ptr.hbm [resolvable:$true] %s304
          %s306 = sshll.u32 [#allocation8], 4
          %s307 = int_to_ptr.vmem [resolvable:$true] %s306
          %309 = dma.hbm_to_vmem [thread:$0]  %s305, 16, %s307, [#allocation9]
        $region28: #{tpu_custom_call.1} parent=11 // pred_fallthru
          _
        // Predicated region
        $region29: #{tpu_custom_call.1} parent=11 // pred_check
          %p310 = pneg %p154
        $region30: #{tpu_custom_call.1} parent=11 // pred_check_branch
          %312 = sbr.rel (%p310) target = $region32
        $region31: #{tpu_custom_call.1} parent=11 // pred_region
          %314 = vsyncadd [#allocation9], 0
          %s315 = sshll.u32 %s5, 4
          %s316 = int_to_ptr.hbm [resolvable:$true] %s315
          %s317 = sshll.u32 [#allocation10], 4
          %s318 = int_to_ptr.vmem [resolvable:$true] %s317
          %323 = dma.hbm_to_vmem [thread:$0]  %s316, 1024, %s318, [#allocation9], 64, 64, 4
        $region32: #{tpu_custom_call.1} parent=11 // pred_fallthru
          _
        // Predicated region
        $region33: #{tpu_custom_call.1} parent=11 // pred_check
          %p324 = pneg %p175
        $region34: #{tpu_custom_call.1} parent=11 // pred_check_branch
          %326 = sbr.rel (%p324) target = $region36
        $region35: #{tpu_custom_call.1} parent=11 // pred_region
          %328 = vsyncadd [#allocation12], 0
          %s330 = sshll.u32 %s6, 4
          %s331 = int_to_ptr.hbm [resolvable:$true] %s330
          %s332 = sshll.u32 [#allocation11], 4
          %s333 = int_to_ptr.vmem [resolvable:$true] %s332
          %335 = dma.hbm_to_vmem [thread:$0]  %s331, 16, %s333, [#allocation12]
        $region36: #{tpu_custom_call.1} parent=11 // pred_fallthru
          _
        // Predicated region
        $region37: #{tpu_custom_call.1} parent=11 // pred_check
          %p336 = pneg %p196
        $region38: #{tpu_custom_call.1} parent=11 // pred_check_branch
          %338 = sbr.rel (%p336) target = $region40
        $region39: #{tpu_custom_call.1} parent=11 // pred_region
          %340 = vsyncadd [#allocation12], 0
          %s341 = sshll.u32 %s7, 4
          %s342 = int_to_ptr.hbm [resolvable:$true] %s341
          %s343 = sshll.u32 [#allocation13], 4
          %s344 = int_to_ptr.vmem [resolvable:$true] %s343
          %349 = dma.hbm_to_vmem [thread:$0]  %s342, 3072, %s344, [#allocation12], 192, 192, 12
        $region40: #{tpu_custom_call.1} parent=11 // pred_fallthru
          _
        // Predicated region
        $region41: #{tpu_custom_call.1} parent=11 // pred_check
          %p350 = pneg %p217
        $region42: #{tpu_custom_call.1} parent=11 // pred_check_branch
          %352 = sbr.rel (%p350) target = $region44
        $region43: #{tpu_custom_call.1} parent=11 // pred_region
          %354 = vsyncadd [#allocation15], 0
          %s356 = sshll.u32 %s8, 4
          %s357 = int_to_ptr.hbm [resolvable:$true] %s356
          %s358 = sshll.u32 [#allocation14], 4
          %s359 = int_to_ptr.vmem [resolvable:$true] %s358
          %361 = dma.hbm_to_vmem [thread:$0]  %s357, 48, %s359, [#allocation15]
        $region44: #{tpu_custom_call.1} parent=11 // pred_fallthru
          _
      $region12: #{tpu_custom_call.1} parent=5 // pred_fallthru
        _
      %p362 = scmp.lt.s32.totalorder %s23, 4
      // Predicated region
      $region45: #{tpu_custom_call.1} parent=5 // pred_check
        %p363 = pneg %p362
      $region46: #{tpu_custom_call.1} parent=5 // pred_check_branch
        %365 = sbr.rel (%p363) target = $region48
      $region47: #{tpu_custom_call.1} parent=5 // pred_region
        // Predicated region
        $region49: #{tpu_custom_call.1} parent=47 // pred_check
          %p366 = pneg %p43
        $region50: #{tpu_custom_call.1} parent=47 // pred_check_branch
          %368 = sbr.rel (%p366) target = $region52
        $region51: #{tpu_custom_call.1} parent=47 // pred_region
          %s369 = smul.u32 32, %s23
          %p370 = scmp.lt.s32.totalorder %s369, 127
          %s371 = scalar_select %p370, %s369, 127
          %s372 = smul.addr %s371, 4
          %s373 = scalar_lea.vmem %s0, %s372
          %s374 = smul.u32 32, %s23
        $region52: #{tpu_custom_call.1} parent=47 // pred_fallthru
          _
      $region48: #{tpu_custom_call.1} parent=5 // pred_fallthru
        _
      %p375 = scmp.le.s32.totalorder 1, %s23
      %p376 = scmp.lt.s32.totalorder %s23, 5
      %p377 = pnand %p375, %p376
      %p378 = pneg %p377
      // Predicated region
      $region53: #{tpu_custom_call.1} parent=5 // pred_check
        _
      $region54: #{tpu_custom_call.1} parent=5 // pred_check_branch
        %380 = sbr.rel (%p377) target = $region56
      $region55: #{tpu_custom_call.1} parent=5 // pred_region
        %s381 = ssub.s32 %s23, 1
        // Predicated region
        $region57: #{tpu_custom_call.1} parent=55 // pred_check
          %p382 = pneg %p70
        $region58: #{tpu_custom_call.1} parent=55 // pred_check_branch
          %384 = sbr.rel (%p382) target = $region60
        $region59: #{tpu_custom_call.1} parent=55 // pred_region
          %386 = dma.done [#allocation3], 256
        $region60: #{tpu_custom_call.1} parent=55 // pred_fallthru
          _
        // Predicated region
        $region61: #{tpu_custom_call.1} parent=55 // pred_check
          %p387 = pneg %p91
        $region62: #{tpu_custom_call.1} parent=55 // pred_check_branch
          %389 = sbr.rel (%p387) target = $region64
        $region63: #{tpu_custom_call.1} parent=55 // pred_region
          %391 = dma.done [#allocation6], 16
        $region64: #{tpu_custom_call.1} parent=55 // pred_fallthru
          _
        // Predicated region
        $region65: #{tpu_custom_call.1} parent=55 // pred_check
          %p392 = pneg %p112
        $region66: #{tpu_custom_call.1} parent=55 // pred_check_branch
          %394 = sbr.rel (%p392) target = $region68
        $region67: #{tpu_custom_call.1} parent=55 // pred_region
          %396 = dma.done [#allocation6], 1024
        $region68: #{tpu_custom_call.1} parent=55 // pred_fallthru
          _
        // Predicated region
        $region69: #{tpu_custom_call.1} parent=55 // pred_check
          %p397 = pneg %p133
        $region70: #{tpu_custom_call.1} parent=55 // pred_check_branch
          %399 = sbr.rel (%p397) target = $region72
        $region71: #{tpu_custom_call.1} parent=55 // pred_region
          %401 = dma.done [#allocation9], 16
        $region72: #{tpu_custom_call.1} parent=55 // pred_fallthru
          _
        // Predicated region
        $region73: #{tpu_custom_call.1} parent=55 // pred_check
          %p402 = pneg %p154
        $region74: #{tpu_custom_call.1} parent=55 // pred_check_branch
          %404 = sbr.rel (%p402) target = $region76
        $region75: #{tpu_custom_call.1} parent=55 // pred_region
          %406 = dma.done [#allocation9], 1024
        $region76: #{tpu_custom_call.1} parent=55 // pred_fallthru
          _
        // Predicated region
        $region77: #{tpu_custom_call.1} parent=55 // pred_check
          %p407 = pneg %p175
        $region78: #{tpu_custom_call.1} parent=55 // pred_check_branch
          %409 = sbr.rel (%p407) target = $region80
        $region79: #{tpu_custom_call.1} parent=55 // pred_region
          %411 = dma.done [#allocation12], 16
        $region80: #{tpu_custom_call.1} parent=55 // pred_fallthru
          _
        // Predicated region
        $region81: #{tpu_custom_call.1} parent=55 // pred_check
          %p412 = pneg %p196
        $region82: #{tpu_custom_call.1} parent=55 // pred_check_branch
          %414 = sbr.rel (%p412) target = $region84
        $region83: #{tpu_custom_call.1} parent=55 // pred_region
          %416 = dma.done [#allocation12], 3072
        $region84: #{tpu_custom_call.1} parent=55 // pred_fallthru
          _
        // Predicated region
        $region85: #{tpu_custom_call.1} parent=55 // pred_check
          %p417 = pneg %p217
        $region86: #{tpu_custom_call.1} parent=55 // pred_check_branch
          %419 = sbr.rel (%p417) target = $region88
        $region87: #{tpu_custom_call.1} parent=55 // pred_region
          %421 = dma.done [#allocation15], 48
        $region88: #{tpu_custom_call.1} parent=55 // pred_fallthru
          _
        %s422 = smul.u32 32, %s28
        %p423 = scmp.lt.s32.totalorder %s422, 127
        %s424 = scalar_select %p423, %s422, 127
        %s425 = smul.addr %s424, 4
        %s426 = scalar_lea.vmem %s0, %s425
        %p427 = pneg %p49
        %p428 = pneg %p46
        %p429 = pneg %p70
        %p430 = pneg %p67
        %p431 = pneg %p91
        %p432 = pneg %p88
        %p433 = pneg %p112
        %p434 = pneg %p109
        %p435 = pneg %p133
        %p436 = pneg %p130
        %p437 = pneg %p154
        %p438 = pneg %p151
        %p439 = pneg %p175
        %p440 = pneg %p172
        %p441 = pneg %p196
        %p442 = pneg %p193
        %p443 = pneg %p217
        %p444 = pneg %p214
        %p445 = pneg %p243
        %p446 = pneg %p240
        %s447 = sand.u32 %s230, 1
        %s448 = scalar_lea.sflag [#allocation4], %s447
        %s449 = sand.u32 %s230, 1
        %s450 = smul.addr %s449, 768
        %s451 = scalar_lea.vmem [#allocation16], %s450
        %s452 = smul.u32 32, %s28
        %p453 = scmp.lt.s32.totalorder %s452, 127
        %s454 = scalar_select %p453, %s452, 127
        %s455 = smul.addr %s454, 4
        %s456 = scalar_lea.vmem %s0, %s455
        %s457 = smul.u32 32, %s28
        %s458 = smul.u32 32, %s28
        %v460 = vld [vmem:[%s456] sm:$0xf]
        %v461 = vld [vmem:[%s456 + $0x4] sm:$0xf]
        %v462 = vld [vmem:[%s456 + $0x8] sm:$0xf]
        %v463 = vld [vmem:[%s456 + $0xc] sm:$0xf]
        %v464 = vld [vmem:[%s456 + $0x10] sm:$0xf]
        %v465 = vld [vmem:[%s456 + $0x14] sm:$0xf]
        %v466 = vld [vmem:[%s456 + $0x18] sm:$0xf]
        %v467 = vld [vmem:[%s456 + $0x1c] sm:$0xf]
        %v468 = vld [vmem:[%s456 + $0x20] sm:$0xf]
        %v469 = vld [vmem:[%s456 + $0x24] sm:$0xf]
        %v470 = vld [vmem:[%s456 + $0x28] sm:$0xf]
        %v471 = vld [vmem:[%s456 + $0x2c] sm:$0xf]
        %v472 = vld [vmem:[%s456 + $0x30] sm:$0xf]
        %v473 = vld [vmem:[%s456 + $0x34] sm:$0xf]
        %v474 = vld [vmem:[%s456 + $0x38] sm:$0xf]
        %v475 = vld [vmem:[%s456 + $0x3c] sm:$0xf]
        %v476 = vld [vmem:[%s456 + $0x40] sm:$0xf]
        %v477 = vld [vmem:[%s456 + $0x44] sm:$0xf]
        %v478 = vld [vmem:[%s456 + $0x48] sm:$0xf]
        %v479 = vld [vmem:[%s456 + $0x4c] sm:$0xf]
        %v480 = vld [vmem:[%s456 + $0x50] sm:$0xf]
        %v481 = vld [vmem:[%s456 + $0x54] sm:$0xf]
        %v482 = vld [vmem:[%s456 + $0x58] sm:$0xf]
        %v483 = vld [vmem:[%s456 + $0x5c] sm:$0xf]
        %v484 = vld [vmem:[%s456 + $0x60] sm:$0xf]
        %v485 = vld [vmem:[%s456 + $0x64] sm:$0xf]
        %v486 = vld [vmem:[%s456 + $0x68] sm:$0xf]
        %v487 = vld [vmem:[%s456 + $0x6c] sm:$0xf]
        %v488 = vld [vmem:[%s456 + $0x70] sm:$0xf]
        %v489 = vld [vmem:[%s456 + $0x74] sm:$0xf]
        %v490 = vld [vmem:[%s456 + $0x78] sm:$0xf]
        %v491 = vld [vmem:[%s456 + $0x7c] sm:$0xf]
        %v492 = vld [vmem:[#allocation2] sm:$0xf]
        %v493 = vld [vmem:[#allocation2 + $0x4] sm:$0xf]
        %v494 = vld [vmem:[#allocation2 + $0x8] sm:$0xf]
        %v495 = vld [vmem:[#allocation2 + $0xc] sm:$0x7]
        %v496 = vld [vmem:[#allocation5] sm:$0x1]
        %v498 = vperm.slane %v496, 0
        %v532 = vunpack.c.l.b16 %v460
        %v533 = vunpack.c.l.b16 %v461
        %v534 = vunpack.c.l.b16 %v462
        %v535 = vunpack.c.l.b16 %v463
        %v536 = vunpack.c.l.b16 %v464
        %v537 = vunpack.c.l.b16 %v465
        %v538 = vunpack.c.l.b16 %v466
        %v539 = vunpack.c.l.b16 %v467
        %v540 = vunpack.c.l.b16 %v468
        %v541 = vunpack.c.l.b16 %v469
        %v542 = vunpack.c.l.b16 %v470
        %v543 = vunpack.c.l.b16 %v471
        %v544 = vunpack.c.l.b16 %v472
        %v545 = vunpack.c.l.b16 %v473
        %v546 = vunpack.c.l.b16 %v474
        %v547 = vunpack.c.l.b16 %v475
        %v548 = vunpack.c.l.b16 %v476
        %v549 = vunpack.c.l.b16 %v477
        %v550 = vunpack.c.l.b16 %v478
        %v551 = vunpack.c.l.b16 %v479
        %v552 = vunpack.c.l.b16 %v480
        %v553 = vunpack.c.l.b16 %v481
        %v554 = vunpack.c.l.b16 %v482
        %v555 = vunpack.c.l.b16 %v483
        %v556 = vunpack.c.l.b16 %v484
        %v557 = vunpack.c.l.b16 %v485
        %v558 = vunpack.c.l.b16 %v486
        %v559 = vunpack.c.l.b16 %v487
        %v560 = vunpack.c.l.b16 %v488
        %v561 = vunpack.c.l.b16 %v489
        %v562 = vunpack.c.l.b16 %v490
        %v563 = vunpack.c.l.b16 %v491
        %v564 = vpack.c.b16 %v533, %v532
        %v565 = vpack.c.b16 %v535, %v534
        %v566 = vpack.c.b16 %v537, %v536
        %v567 = vpack.c.b16 %v539, %v538
        %v568 = vpack.c.b16 %v541, %v540
        %v569 = vpack.c.b16 %v543, %v542
        %v570 = vpack.c.b16 %v545, %v544
        %v571 = vpack.c.b16 %v547, %v546
        %v572 = vpack.c.b16 %v549, %v548
        %v573 = vpack.c.b16 %v551, %v550
        %v574 = vpack.c.b16 %v553, %v552
        %v575 = vpack.c.b16 %v555, %v554
        %v576 = vpack.c.b16 %v557, %v556
        %v577 = vpack.c.b16 %v559, %v558
        %v578 = vpack.c.b16 %v561, %v560
        %v579 = vpack.c.b16 %v563, %v562
        %v584 = vunpack.c.l.b16 %v492
        %v585 = vunpack.c.l.b16 %v493
        %v586 = vunpack.c.l.b16 %v494
        %v587 = vunpack.c.l.b16 %v495
        %v588 = vpack.c.b16 %v585, %v584
        %v589 = vpack.c.b16 %v587, %v586
        %vm591 = vcmask 244736
        %v593 = vsel %vm591, %v564, 0
        %v596 = vsel %vm591, %v565, 0
        %v599 = vsel %vm591, %v566, 0
        %v602 = vsel %vm591, %v567, 0
        %v605 = vsel %vm591, %v568, 0
        %v608 = vsel %vm591, %v569, 0
        %v611 = vsel %vm591, %v570, 0
        %v614 = vsel %vm591, %v571, 0
        %v617 = vsel %vm591, %v572, 0
        %v620 = vsel %vm591, %v573, 0
        %v623 = vsel %vm591, %v574, 0
        %v626 = vsel %vm591, %v575, 0
        %v629 = vsel %vm591, %v576, 0
        %v632 = vsel %vm591, %v577, 0
        %v635 = vsel %vm591, %v578, 0
        %v638 = vsel %vm591, %v579, 0
        %vm640 = vcmask 1046528
        %v642 = vsel %vm640, %v589, 0
        %644 = vmatpush.bf16.msra.mxu0 0
        %645 = vmatpush.bf16.msra.mxu0 0
        %646 = vmatpush.bf16.msra.mxu0 0
        %647 = vmatpush.bf16.msra.mxu0 0
        %648 = vmatpush.bf16.msra.mxu0 0
        %649 = vmatpush.bf16.msra.mxu0 0
        %650 = vmatpush.bf16.msra.mxu0 %v642
        %651 = vmatpush.bf16.msra.mxu0 %v588
        %652 = vmatmul.bf16.gmra.mxu0 %v593
        %v653 = vpop.f32.mrf.mxu0
        %v654 = vadd.f32 %v498, %v653
        %v655 = vpop.f32.mrf.mxu0
        %v656 = vadd.f32 %v498, %v655
        %657 = vmatmul.bf16.gmra.mxu0 %v596
        %v658 = vpop.f32.mrf.mxu0
        %v659 = vadd.f32 %v498, %v658
        %v660 = vpop.f32.mrf.mxu0
        %v661 = vadd.f32 %v498, %v660
        %662 = vmatmul.bf16.gmra.mxu0 %v599
        %v663 = vpop.f32.mrf.mxu0
        %v664 = vadd.f32 %v498, %v663
        %v665 = vpop.f32.mrf.mxu0
        %v666 = vadd.f32 %v498, %v665
        %667 = vmatmul.bf16.gmra.mxu0 %v602
        %v668 = vpop.f32.mrf.mxu0
        %v669 = vadd.f32 %v498, %v668
        %v670 = vpop.f32.mrf.mxu0
        %v671 = vadd.f32 %v498, %v670
        %672 = vmatmul.bf16.gmra.mxu0 %v605
        %v673 = vpop.f32.mrf.mxu0
        %v674 = vadd.f32 %v498, %v673
        %v675 = vpop.f32.mrf.mxu0
        %v676 = vadd.f32 %v498, %v675
        %677 = vmatmul.bf16.gmra.mxu0 %v608
        %v678 = vpop.f32.mrf.mxu0
        %v679 = vadd.f32 %v498, %v678
        %v680 = vpop.f32.mrf.mxu0
        %v681 = vadd.f32 %v498, %v680
        %682 = vmatmul.bf16.gmra.mxu0 %v611
        %v683 = vpop.f32.mrf.mxu0
        %v684 = vadd.f32 %v498, %v683
        %v685 = vpop.f32.mrf.mxu0
        %v686 = vadd.f32 %v498, %v685
        %687 = vmatmul.bf16.gmra.mxu0 %v614
        %v688 = vpop.f32.mrf.mxu0
        %v689 = vadd.f32 %v498, %v688
        %v690 = vpop.f32.mrf.mxu0
        %v691 = vadd.f32 %v498, %v690
        %692 = vmatmul.bf16.gmra.mxu0 %v617
        %v693 = vpop.f32.mrf.mxu0
        %v694 = vadd.f32 %v498, %v693
        %v695 = vpop.f32.mrf.mxu0
        %v696 = vadd.f32 %v498, %v695
        %697 = vmatmul.bf16.gmra.mxu0 %v620
        %v698 = vpop.f32.mrf.mxu0
        %v699 = vadd.f32 %v498, %v698
        %v700 = vpop.f32.mrf.mxu0
        %v701 = vadd.f32 %v498, %v700
        %702 = vmatmul.bf16.gmra.mxu0 %v623
        %v703 = vpop.f32.mrf.mxu0
        %v704 = vadd.f32 %v498, %v703
        %v705 = vpop.f32.mrf.mxu0
        %v706 = vadd.f32 %v498, %v705
        %707 = vmatmul.bf16.gmra.mxu0 %v626
        %v708 = vpop.f32.mrf.mxu0
        %v709 = vadd.f32 %v498, %v708
        %v710 = vpop.f32.mrf.mxu0
        %v711 = vadd.f32 %v498, %v710
        %712 = vmatmul.bf16.gmra.mxu0 %v629
        %v713 = vpop.f32.mrf.mxu0
        %v714 = vadd.f32 %v498, %v713
        %v715 = vpop.f32.mrf.mxu0
        %v716 = vadd.f32 %v498, %v715
        %717 = vmatmul.bf16.gmra.mxu0 %v632
        %v718 = vpop.f32.mrf.mxu0
        %v719 = vadd.f32 %v498, %v718
        %v720 = vpop.f32.mrf.mxu0
        %v721 = vadd.f32 %v498, %v720
        %722 = vmatmul.bf16.gmra.mxu0 %v635
        %v723 = vpop.f32.mrf.mxu0
        %v724 = vadd.f32 %v498, %v723
        %v725 = vpop.f32.mrf.mxu0
        %v726 = vadd.f32 %v498, %v725
        %727 = vmatmul.bf16.gmra.mxu0 %v638
        %v728 = vpop.f32.mrf.mxu0
        %v729 = vadd.f32 %v498, %v728
        %v730 = vpop.f32.mrf.mxu0
        %v731 = vadd.f32 %v498, %v730
        %732 = vdwg.mxu0
        %v733 = vmax.f32 %v654, 0.0
        %v734 = vmax.f32 %v656, 0.0
        %v735 = vmax.f32 %v659, 0.0
        %v736 = vmax.f32 %v661, 0.0
        %v737 = vmax.f32 %v664, 0.0
        %v738 = vmax.f32 %v666, 0.0
        %v739 = vmax.f32 %v669, 0.0
        %v740 = vmax.f32 %v671, 0.0
        %v741 = vmax.f32 %v674, 0.0
        %v742 = vmax.f32 %v676, 0.0
        %v743 = vmax.f32 %v679, 0.0
        %v744 = vmax.f32 %v681, 0.0
        %v745 = vmax.f32 %v684, 0.0
        %v746 = vmax.f32 %v686, 0.0
        %v747 = vmax.f32 %v689, 0.0
        %v748 = vmax.f32 %v691, 0.0
        %v749 = vmax.f32 %v694, 0.0
        %v750 = vmax.f32 %v696, 0.0
        %v751 = vmax.f32 %v699, 0.0
        %v752 = vmax.f32 %v701, 0.0
        %v753 = vmax.f32 %v704, 0.0
        %v754 = vmax.f32 %v706, 0.0
        %v755 = vmax.f32 %v709, 0.0
        %v756 = vmax.f32 %v711, 0.0
        %v757 = vmax.f32 %v714, 0.0
        %v758 = vmax.f32 %v716, 0.0
        %v759 = vmax.f32 %v719, 0.0
        %v760 = vmax.f32 %v721, 0.0
        %v761 = vmax.f32 %v724, 0.0
        %v762 = vmax.f32 %v726, 0.0
        %v763 = vmax.f32 %v729, 0.0
        %v764 = vmax.f32 %v731, 0.0
        %v765 = vpack.c.bf16 %v734, %v733
        %v766 = vpack.c.bf16 %v736, %v735
        %v767 = vpack.c.bf16 %v738, %v737
        %v768 = vpack.c.bf16 %v740, %v739
        %v769 = vpack.c.bf16 %v742, %v741
        %v770 = vpack.c.bf16 %v744, %v743
        %v771 = vpack.c.bf16 %v746, %v745
        %v772 = vpack.c.bf16 %v748, %v747
        %v773 = vpack.c.bf16 %v750, %v749
        %v774 = vpack.c.bf16 %v752, %v751
        %v775 = vpack.c.bf16 %v754, %v753
        %v776 = vpack.c.bf16 %v756, %v755
        %v777 = vpack.c.bf16 %v758, %v757
        %v778 = vpack.c.bf16 %v760, %v759
        %v779 = vpack.c.bf16 %v762, %v761
        %v780 = vpack.c.bf16 %v764, %v763
        %v781 = vld [vmem:[#allocation7] sm:$0xf]
        %v782 = vld [vmem:[#allocation7 + $0x4] sm:$0xf]
        %v783 = vld [vmem:[#allocation7 + $0x8] sm:$0xf]
        %v784 = vld [vmem:[#allocation7 + $0xc] sm:$0xf]
        %v785 = vld [vmem:[#allocation7 + $0x10] sm:$0xf]
        %v786 = vld [vmem:[#allocation7 + $0x14] sm:$0xf]
        %v787 = vld [vmem:[#allocation7 + $0x18] sm:$0xf]
        %v788 = vld [vmem:[#allocation7 + $0x1c] sm:$0xf]
        %v789 = vld [vmem:[#allocation7 + $0x20] sm:$0xf]
        %v790 = vld [vmem:[#allocation7 + $0x24] sm:$0xf]
        %v791 = vld [vmem:[#allocation7 + $0x28] sm:$0xf]
        %v792 = vld [vmem:[#allocation7 + $0x2c] sm:$0xf]
        %v793 = vld [vmem:[#allocation7 + $0x30] sm:$0xf]
        %v794 = vld [vmem:[#allocation7 + $0x34] sm:$0xf]
        %v795 = vld [vmem:[#allocation7 + $0x38] sm:$0xf]
        %v796 = vld [vmem:[#allocation7 + $0x3c] sm:$0xf]
        %v797 = vld [vmem:[#allocation8] sm:$0x1]
        %v799 = vperm.slane %v797, 0
        %v817 = vunpack.c.l.b16 %v781
        %v818 = vunpack.c.l.b16 %v782
        %v819 = vunpack.c.l.b16 %v783
        %v820 = vunpack.c.l.b16 %v784
        %v821 = vunpack.c.l.b16 %v785
        %v822 = vunpack.c.l.b16 %v786
        %v823 = vunpack.c.l.b16 %v787
        %v824 = vunpack.c.l.b16 %v788
        %v825 = vunpack.c.l.b16 %v789
        %v826 = vunpack.c.l.b16 %v790
        %v827 = vunpack.c.l.b16 %v791
        %v828 = vunpack.c.l.b16 %v792
        %v829 = vunpack.c.l.b16 %v793
        %v830 = vunpack.c.l.b16 %v794
        %v831 = vunpack.c.l.b16 %v795
        %v832 = vunpack.c.l.b16 %v796
        %v833 = vpack.c.b16 %v818, %v817
        %v834 = vpack.c.b16 %v820, %v819
        %v835 = vpack.c.b16 %v822, %v821
        %v836 = vpack.c.b16 %v824, %v823
        %v837 = vpack.c.b16 %v826, %v825
        %v838 = vpack.c.b16 %v828, %v827
        %v839 = vpack.c.b16 %v830, %v829
        %v840 = vpack.c.b16 %v832, %v831
        %849 = vmatpush.bf16.msra.mxu0 %v840
        %850 = vmatpush.bf16.msra.mxu0 %v839
        %851 = vmatpush.bf16.msra.mxu0 %v838
        %852 = vmatpush.bf16.msra.mxu0 %v837
        %853 = vmatpush.bf16.msra.mxu0 %v836
        %854 = vmatpush.bf16.msra.mxu0 %v835
        %855 = vmatpush.bf16.msra.mxu0 %v834
        %856 = vmatpush.bf16.msra.mxu0 %v833
        %857 = vmatmul.bf16.gmra.mxu0 %v765
        %v858 = vpop.f32.mrf.mxu0
        %v859 = vadd.f32 %v799, %v858
        %v860 = vpop.f32.mrf.mxu0
        %v861 = vadd.f32 %v799, %v860
        %862 = vmatmul.bf16.gmra.mxu0 %v766
        %v863 = vpop.f32.mrf.mxu0
        %v864 = vadd.f32 %v799, %v863
        %v865 = vpop.f32.mrf.mxu0
        %v866 = vadd.f32 %v799, %v865
        %867 = vmatmul.bf16.gmra.mxu0 %v767
        %v868 = vpop.f32.mrf.mxu0
        %v869 = vadd.f32 %v799, %v868
        %v870 = vpop.f32.mrf.mxu0
        %v871 = vadd.f32 %v799, %v870
        %872 = vmatmul.bf16.gmra.mxu0 %v768
        %v873 = vpop.f32.mrf.mxu0
        %v874 = vadd.f32 %v799, %v873
        %v875 = vpop.f32.mrf.mxu0
        %v876 = vadd.f32 %v799, %v875
        %877 = vmatmul.bf16.gmra.mxu0 %v769
        %v878 = vpop.f32.mrf.mxu0
        %v879 = vadd.f32 %v799, %v878
        %v880 = vpop.f32.mrf.mxu0
        %v881 = vadd.f32 %v799, %v880
        %882 = vmatmul.bf16.gmra.mxu0 %v770
        %v883 = vpop.f32.mrf.mxu0
        %v884 = vadd.f32 %v799, %v883
        %v885 = vpop.f32.mrf.mxu0
        %v886 = vadd.f32 %v799, %v885
        %887 = vmatmul.bf16.gmra.mxu0 %v771
        %v888 = vpop.f32.mrf.mxu0
        %v889 = vadd.f32 %v799, %v888
        %v890 = vpop.f32.mrf.mxu0
        %v891 = vadd.f32 %v799, %v890
        %892 = vmatmul.bf16.gmra.mxu0 %v772
        %v893 = vpop.f32.mrf.mxu0
        %v894 = vadd.f32 %v799, %v893
        %v895 = vpop.f32.mrf.mxu0
        %v896 = vadd.f32 %v799, %v895
        %897 = vmatmul.bf16.gmra.mxu0 %v773
        %v898 = vpop.f32.mrf.mxu0
        %v899 = vadd.f32 %v799, %v898
        %v900 = vpop.f32.mrf.mxu0
        %v901 = vadd.f32 %v799, %v900
        %902 = vmatmul.bf16.gmra.mxu0 %v774
        %v903 = vpop.f32.mrf.mxu0
        %v904 = vadd.f32 %v799, %v903
        %v905 = vpop.f32.mrf.mxu0
        %v906 = vadd.f32 %v799, %v905
        %907 = vmatmul.bf16.gmra.mxu0 %v775
        %v908 = vpop.f32.mrf.mxu0
        %v909 = vadd.f32 %v799, %v908
        %v910 = vpop.f32.mrf.mxu0
        %v911 = vadd.f32 %v799, %v910
        %912 = vmatmul.bf16.gmra.mxu0 %v776
        %v913 = vpop.f32.mrf.mxu0
        %v914 = vadd.f32 %v799, %v913
        %v915 = vpop.f32.mrf.mxu0
        %v916 = vadd.f32 %v799, %v915
        %917 = vmatmul.bf16.gmra.mxu0 %v777
        %v918 = vpop.f32.mrf.mxu0
        %v919 = vadd.f32 %v799, %v918
        %v920 = vpop.f32.mrf.mxu0
        %v921 = vadd.f32 %v799, %v920
        %922 = vmatmul.bf16.gmra.mxu0 %v778
        %v923 = vpop.f32.mrf.mxu0
        %v924 = vadd.f32 %v799, %v923
        %v925 = vpop.f32.mrf.mxu0
        %v926 = vadd.f32 %v799, %v925
        %927 = vmatmul.bf16.gmra.mxu0 %v779
        %v928 = vpop.f32.mrf.mxu0
        %v929 = vadd.f32 %v799, %v928
        %v930 = vpop.f32.mrf.mxu0
        %v931 = vadd.f32 %v799, %v930
        %932 = vmatmul.bf16.gmra.mxu0 %v780
        %v933 = vpop.f32.mrf.mxu0
        %v934 = vadd.f32 %v799, %v933
        %v935 = vpop.f32.mrf.mxu0
        %v936 = vadd.f32 %v799, %v935
        %937 = vdwg.mxu0
        %v938 = vmax.f32 %v859, 0.0
        %v939 = vmax.f32 %v861, 0.0
        %v940 = vmax.f32 %v864, 0.0
        %v941 = vmax.f32 %v866, 0.0
        %v942 = vmax.f32 %v869, 0.0
        %v943 = vmax.f32 %v871, 0.0
        %v944 = vmax.f32 %v874, 0.0
        %v945 = vmax.f32 %v876, 0.0
        %v946 = vmax.f32 %v879, 0.0
        %v947 = vmax.f32 %v881, 0.0
        %v948 = vmax.f32 %v884, 0.0
        %v949 = vmax.f32 %v886, 0.0
        %v950 = vmax.f32 %v889, 0.0
        %v951 = vmax.f32 %v891, 0.0
        %v952 = vmax.f32 %v894, 0.0
        %v953 = vmax.f32 %v896, 0.0
        %v954 = vmax.f32 %v899, 0.0
        %v955 = vmax.f32 %v901, 0.0
        %v956 = vmax.f32 %v904, 0.0
        %v957 = vmax.f32 %v906, 0.0
        %v958 = vmax.f32 %v909, 0.0
        %v959 = vmax.f32 %v911, 0.0
        %v960 = vmax.f32 %v914, 0.0
        %v961 = vmax.f32 %v916, 0.0
        %v962 = vmax.f32 %v919, 0.0
        %v963 = vmax.f32 %v921, 0.0
        %v964 = vmax.f32 %v924, 0.0
        %v965 = vmax.f32 %v926, 0.0
        %v966 = vmax.f32 %v929, 0.0
        %v967 = vmax.f32 %v931, 0.0
        %v968 = vmax.f32 %v934, 0.0
        %v969 = vmax.f32 %v936, 0.0
        %v970 = vpack.c.bf16 %v939, %v938
        %v971 = vpack.c.bf16 %v941, %v940
        %v972 = vpack.c.bf16 %v943, %v942
        %v973 = vpack.c.bf16 %v945, %v944
        %v974 = vpack.c.bf16 %v947, %v946
        %v975 = vpack.c.bf16 %v949, %v948
        %v976 = vpack.c.bf16 %v951, %v950
        %v977 = vpack.c.bf16 %v953, %v952
        %v978 = vpack.c.bf16 %v955, %v954
        %v979 = vpack.c.bf16 %v957, %v956
        %v980 = vpack.c.bf16 %v959, %v958
        %v981 = vpack.c.bf16 %v961, %v960
        %v982 = vpack.c.bf16 %v963, %v962
        %v983 = vpack.c.bf16 %v965, %v964
        %v984 = vpack.c.bf16 %v967, %v966
        %v985 = vpack.c.bf16 %v969, %v968
        %v986 = vld [vmem:[#allocation10] sm:$0xf]
        %v987 = vld [vmem:[#allocation10 + $0x4] sm:$0xf]
        %v988 = vld [vmem:[#allocation10 + $0x8] sm:$0xf]
        %v989 = vld [vmem:[#allocation10 + $0xc] sm:$0xf]
        %v990 = vld [vmem:[#allocation10 + $0x10] sm:$0xf]
        %v991 = vld [vmem:[#allocation10 + $0x14] sm:$0xf]
        %v992 = vld [vmem:[#allocation10 + $0x18] sm:$0xf]
        %v993 = vld [vmem:[#allocation10 + $0x1c] sm:$0xf]
        %v994 = vld [vmem:[#allocation10 + $0x20] sm:$0xf]
        %v995 = vld [vmem:[#allocation10 + $0x24] sm:$0xf]
        %v996 = vld [vmem:[#allocation10 + $0x28] sm:$0xf]
        %v997 = vld [vmem:[#allocation10 + $0x2c] sm:$0xf]
        %v998 = vld [vmem:[#allocation10 + $0x30] sm:$0xf]
        %v999 = vld [vmem:[#allocation10 + $0x34] sm:$0xf]
        %v1000 = vld [vmem:[#allocation10 + $0x38] sm:$0xf]
        %v1001 = vld [vmem:[#allocation10 + $0x3c] sm:$0xf]
        %v1002 = vld [vmem:[#allocation11] sm:$0x1]
        %v1004 = vperm.slane %v1002, 0
        %v1022 = vunpack.c.l.b16 %v986
        %v1023 = vunpack.c.l.b16 %v987
        %v1024 = vunpack.c.l.b16 %v988
        %v1025 = vunpack.c.l.b16 %v989
        %v1026 = vunpack.c.l.b16 %v990
        %v1027 = vunpack.c.l.b16 %v991
        %v1028 = vunpack.c.l.b16 %v992
        %v1029 = vunpack.c.l.b16 %v993
        %v1030 = vunpack.c.l.b16 %v994
        %v1031 = vunpack.c.l.b16 %v995
        %v1032 = vunpack.c.l.b16 %v996
        %v1033 = vunpack.c.l.b16 %v997
        %v1034 = vunpack.c.l.b16 %v998
        %v1035 = vunpack.c.l.b16 %v999
        %v1036 = vunpack.c.l.b16 %v1000
        %v1037 = vunpack.c.l.b16 %v1001
        %v1038 = vpack.c.b16 %v1023, %v1022
        %v1039 = vpack.c.b16 %v1025, %v1024
        %v1040 = vpack.c.b16 %v1027, %v1026
        %v1041 = vpack.c.b16 %v1029, %v1028
        %v1042 = vpack.c.b16 %v1031, %v1030
        %v1043 = vpack.c.b16 %v1033, %v1032
        %v1044 = vpack.c.b16 %v1035, %v1034
        %v1045 = vpack.c.b16 %v1037, %v1036
        %1054 = vmatpush.bf16.msra.mxu0 %v1045
        %1055 = vmatpush.bf16.msra.mxu0 %v1044
        %1056 = vmatpush.bf16.msra.mxu0 %v1043
        %1057 = vmatpush.bf16.msra.mxu0 %v1042
        %1058 = vmatpush.bf16.msra.mxu0 %v1041
        %1059 = vmatpush.bf16.msra.mxu0 %v1040
        %1060 = vmatpush.bf16.msra.mxu0 %v1039
        %1061 = vmatpush.bf16.msra.mxu0 %v1038
        %1062 = vmatmul.bf16.gmra.mxu0 %v970
        %v1063 = vpop.f32.mrf.mxu0
        %v1064 = vadd.f32 %v1004, %v1063
        %v1065 = vpop.f32.mrf.mxu0
        %v1066 = vadd.f32 %v1004, %v1065
        %1067 = vmatmul.bf16.gmra.mxu0 %v971
        %v1068 = vpop.f32.mrf.mxu0
        %v1069 = vadd.f32 %v1004, %v1068
        %v1070 = vpop.f32.mrf.mxu0
        %v1071 = vadd.f32 %v1004, %v1070
        %1072 = vmatmul.bf16.gmra.mxu0 %v972
        %v1073 = vpop.f32.mrf.mxu0
        %v1074 = vadd.f32 %v1004, %v1073
        %v1075 = vpop.f32.mrf.mxu0
        %v1076 = vadd.f32 %v1004, %v1075
        %1077 = vmatmul.bf16.gmra.mxu0 %v973
        %v1078 = vpop.f32.mrf.mxu0
        %v1079 = vadd.f32 %v1004, %v1078
        %v1080 = vpop.f32.mrf.mxu0
        %v1081 = vadd.f32 %v1004, %v1080
        %1082 = vmatmul.bf16.gmra.mxu0 %v974
        %v1083 = vpop.f32.mrf.mxu0
        %v1084 = vadd.f32 %v1004, %v1083
        %v1085 = vpop.f32.mrf.mxu0
        %v1086 = vadd.f32 %v1004, %v1085
        %1087 = vmatmul.bf16.gmra.mxu0 %v975
        %v1088 = vpop.f32.mrf.mxu0
        %v1089 = vadd.f32 %v1004, %v1088
        %v1090 = vpop.f32.mrf.mxu0
        %v1091 = vadd.f32 %v1004, %v1090
        %1092 = vmatmul.bf16.gmra.mxu0 %v976
        %v1093 = vpop.f32.mrf.mxu0
        %v1094 = vadd.f32 %v1004, %v1093
        %v1095 = vpop.f32.mrf.mxu0
        %v1096 = vadd.f32 %v1004, %v1095
        %1097 = vmatmul.bf16.gmra.mxu0 %v977
        %v1098 = vpop.f32.mrf.mxu0
        %v1099 = vadd.f32 %v1004, %v1098
        %v1100 = vpop.f32.mrf.mxu0
        %v1101 = vadd.f32 %v1004, %v1100
        %1102 = vmatmul.bf16.gmra.mxu0 %v978
        %v1103 = vpop.f32.mrf.mxu0
        %v1104 = vadd.f32 %v1004, %v1103
        %v1105 = vpop.f32.mrf.mxu0
        %v1106 = vadd.f32 %v1004, %v1105
        %1107 = vmatmul.bf16.gmra.mxu0 %v979
        %v1108 = vpop.f32.mrf.mxu0
        %v1109 = vadd.f32 %v1004, %v1108
        %v1110 = vpop.f32.mrf.mxu0
        %v1111 = vadd.f32 %v1004, %v1110
        %1112 = vmatmul.bf16.gmra.mxu0 %v980
        %v1113 = vpop.f32.mrf.mxu0
        %v1114 = vadd.f32 %v1004, %v1113
        %v1115 = vpop.f32.mrf.mxu0
        %v1116 = vadd.f32 %v1004, %v1115
        %1117 = vmatmul.bf16.gmra.mxu0 %v981
        %v1118 = vpop.f32.mrf.mxu0
        %v1119 = vadd.f32 %v1004, %v1118
        %v1120 = vpop.f32.mrf.mxu0
        %v1121 = vadd.f32 %v1004, %v1120
        %1122 = vmatmul.bf16.gmra.mxu0 %v982
        %v1123 = vpop.f32.mrf.mxu0
        %v1124 = vadd.f32 %v1004, %v1123
        %v1125 = vpop.f32.mrf.mxu0
        %v1126 = vadd.f32 %v1004, %v1125
        %1127 = vmatmul.bf16.gmra.mxu0 %v983
        %v1128 = vpop.f32.mrf.mxu0
        %v1129 = vadd.f32 %v1004, %v1128
        %v1130 = vpop.f32.mrf.mxu0
        %v1131 = vadd.f32 %v1004, %v1130
        %1132 = vmatmul.bf16.gmra.mxu0 %v984
        %v1133 = vpop.f32.mrf.mxu0
        %v1134 = vadd.f32 %v1004, %v1133
        %v1135 = vpop.f32.mrf.mxu0
        %v1136 = vadd.f32 %v1004, %v1135
        %1137 = vmatmul.bf16.gmra.mxu0 %v985
        %v1138 = vpop.f32.mrf.mxu0
        %v1139 = vadd.f32 %v1004, %v1138
        %v1140 = vpop.f32.mrf.mxu0
        %v1141 = vadd.f32 %v1004, %v1140
        %1142 = vdwg.mxu0
        %v1143 = vmax.f32 %v1064, 0.0
        %v1144 = vmax.f32 %v1066, 0.0
        %v1145 = vmax.f32 %v1069, 0.0
        %v1146 = vmax.f32 %v1071, 0.0
        %v1147 = vmax.f32 %v1074, 0.0
        %v1148 = vmax.f32 %v1076, 0.0
        %v1149 = vmax.f32 %v1079, 0.0
        %v1150 = vmax.f32 %v1081, 0.0
        %v1151 = vmax.f32 %v1084, 0.0
        %v1152 = vmax.f32 %v1086, 0.0
        %v1153 = vmax.f32 %v1089, 0.0
        %v1154 = vmax.f32 %v1091, 0.0
        %v1155 = vmax.f32 %v1094, 0.0
        %v1156 = vmax.f32 %v1096, 0.0
        %v1157 = vmax.f32 %v1099, 0.0
        %v1158 = vmax.f32 %v1101, 0.0
        %v1159 = vmax.f32 %v1104, 0.0
        %v1160 = vmax.f32 %v1106, 0.0
        %v1161 = vmax.f32 %v1109, 0.0
        %v1162 = vmax.f32 %v1111, 0.0
        %v1163 = vmax.f32 %v1114, 0.0
        %v1164 = vmax.f32 %v1116, 0.0
        %v1165 = vmax.f32 %v1119, 0.0
        %v1166 = vmax.f32 %v1121, 0.0
        %v1167 = vmax.f32 %v1124, 0.0
        %v1168 = vmax.f32 %v1126, 0.0
        %v1169 = vmax.f32 %v1129, 0.0
        %v1170 = vmax.f32 %v1131, 0.0
        %v1171 = vmax.f32 %v1134, 0.0
        %v1172 = vmax.f32 %v1136, 0.0
        %v1173 = vmax.f32 %v1139, 0.0
        %v1174 = vmax.f32 %v1141, 0.0
        %v1175 = vpack.c.bf16 %v1144, %v1143
        %v1176 = vpack.c.bf16 %v1146, %v1145
        %v1177 = vpack.c.bf16 %v1148, %v1147
        %v1178 = vpack.c.bf16 %v1150, %v1149
        %v1179 = vpack.c.bf16 %v1152, %v1151
        %v1180 = vpack.c.bf16 %v1154, %v1153
        %v1181 = vpack.c.bf16 %v1156, %v1155
        %v1182 = vpack.c.bf16 %v1158, %v1157
        %v1183 = vpack.c.bf16 %v1160, %v1159
        %v1184 = vpack.c.bf16 %v1162, %v1161
        %v1185 = vpack.c.bf16 %v1164, %v1163
        %v1186 = vpack.c.bf16 %v1166, %v1165
        %v1187 = vpack.c.bf16 %v1168, %v1167
        %v1188 = vpack.c.bf16 %v1170, %v1169
        %v1189 = vpack.c.bf16 %v1172, %v1171
        %v1190 = vpack.c.bf16 %v1174, %v1173
        %v1191 = vld [vmem:[#allocation13] sm:$0xff]
        %v1192 = vld [vmem:[#allocation13 + $0x8] sm:$0xf]
        %v1193 = vld [vmem:[#allocation13 + $0xc] sm:$0xff]
        %v1194 = vld [vmem:[#allocation13 + $0x14] sm:$0xf]
        %v1195 = vld [vmem:[#allocation13 + $0x18] sm:$0xff]
        %v1196 = vld [vmem:[#allocation13 + $0x20] sm:$0xf]
        %v1197 = vld [vmem:[#allocation13 + $0x24] sm:$0xff]
        %v1198 = vld [vmem:[#allocation13 + $0x2c] sm:$0xf]
        %v1199 = vld [vmem:[#allocation13 + $0x30] sm:$0xff]
        %v1200 = vld [vmem:[#allocation13 + $0x38] sm:$0xf]
        %v1201 = vld [vmem:[#allocation13 + $0x3c] sm:$0xff]
        %v1202 = vld [vmem:[#allocation13 + $0x44] sm:$0xf]
        %v1203 = vld [vmem:[#allocation13 + $0x48] sm:$0xff]
        %v1204 = vld [vmem:[#allocation13 + $0x50] sm:$0xf]
        %v1205 = vld [vmem:[#allocation13 + $0x54] sm:$0xff]
        %v1206 = vld [vmem:[#allocation13 + $0x5c] sm:$0xf]
        %v1207 = vld [vmem:[#allocation13 + $0x60] sm:$0xff]
        %v1208 = vld [vmem:[#allocation13 + $0x68] sm:$0xf]
        %v1209 = vld [vmem:[#allocation13 + $0x6c] sm:$0xff]
        %v1210 = vld [vmem:[#allocation13 + $0x74] sm:$0xf]
        %v1211 = vld [vmem:[#allocation13 + $0x78] sm:$0xff]
        %v1212 = vld [vmem:[#allocation13 + $0x80] sm:$0xf]
        %v1213 = vld [vmem:[#allocation13 + $0x84] sm:$0xff]
        %v1214 = vld [vmem:[#allocation13 + $0x8c] sm:$0xf]
        %v1215 = vld [vmem:[#allocation13 + $0x90] sm:$0xff]
        %v1216 = vld [vmem:[#allocation13 + $0x98] sm:$0xf]
        %v1217 = vld [vmem:[#allocation13 + $0x9c] sm:$0xff]
        %v1218 = vld [vmem:[#allocation13 + $0xa4] sm:$0xf]
        %v1219 = vld [vmem:[#allocation13 + $0xa8] sm:$0xff]
        %v1220 = vld [vmem:[#allocation13 + $0xb0] sm:$0xf]
        %v1221 = vld [vmem:[#allocation13 + $0xb4] sm:$0xff]
        %v1222 = vld [vmem:[#allocation13 + $0xbc] sm:$0xf]
        %v1223 = vld [vmem:[#allocation14] sm:$0x7]
        %v1225 = vperm.slane %v1223, 0
        %v1226 = vperm.slane %v1223, 1
        %v1227 = vperm.slane %v1223, 2
        %v1263 = vunpack.c.l.b16 %v1191
        %v1264 = vunpack.c.h.b16 %v1191
        %v1265 = vunpack.c.l.b16 %v1192
        %v1266 = vunpack.c.l.b16 %v1193
        %v1267 = vunpack.c.h.b16 %v1193
        %v1268 = vunpack.c.l.b16 %v1194
        %v1269 = vunpack.c.l.b16 %v1195
        %v1270 = vunpack.c.h.b16 %v1195
        %v1271 = vunpack.c.l.b16 %v1196
        %v1272 = vunpack.c.l.b16 %v1197
        %v1273 = vunpack.c.h.b16 %v1197
        %v1274 = vunpack.c.l.b16 %v1198
        %v1275 = vunpack.c.l.b16 %v1199
        %v1276 = vunpack.c.h.b16 %v1199
        %v1277 = vunpack.c.l.b16 %v1200
        %v1278 = vunpack.c.l.b16 %v1201
        %v1279 = vunpack.c.h.b16 %v1201
        %v1280 = vunpack.c.l.b16 %v1202
        %v1281 = vunpack.c.l.b16 %v1203
        %v1282 = vunpack.c.h.b16 %v1203
        %v1283 = vunpack.c.l.b16 %v1204
        %v1284 = vunpack.c.l.b16 %v1205
        %v1285 = vunpack.c.h.b16 %v1205
        %v1286 = vunpack.c.l.b16 %v1206
        %v1287 = vunpack.c.l.b16 %v1207
        %v1288 = vunpack.c.h.b16 %v1207
        %v1289 = vunpack.c.l.b16 %v1208
        %v1290 = vunpack.c.l.b16 %v1209
        %v1291 = vunpack.c.h.b16 %v1209
        %v1292 = vunpack.c.l.b16 %v1210
        %v1293 = vunpack.c.l.b16 %v1211
        %v1294 = vunpack.c.h.b16 %v1211
        %v1295 = vunpack.c.l.b16 %v1212
        %v1296 = vunpack.c.l.b16 %v1213
        %v1297 = vunpack.c.h.b16 %v1213
        %v1298 = vunpack.c.l.b16 %v1214
        %v1299 = vunpack.c.l.b16 %v1215
        %v1300 = vunpack.c.h.b16 %v1215
        %v1301 = vunpack.c.l.b16 %v1216
        %v1302 = vunpack.c.l.b16 %v1217
        %v1303 = vunpack.c.h.b16 %v1217
        %v1304 = vunpack.c.l.b16 %v1218
        %v1305 = vunpack.c.l.b16 %v1219
        %v1306 = vunpack.c.h.b16 %v1219
        %v1307 = vunpack.c.l.b16 %v1220
        %v1308 = vunpack.c.l.b16 %v1221
        %v1309 = vunpack.c.h.b16 %v1221
        %v1310 = vunpack.c.l.b16 %v1222
        %v1311 = vpack.c.b16 %v1266, %v1263
        %v1312 = vpack.c.b16 %v1267, %v1264
        %v1313 = vpack.c.b16 %v1268, %v1265
        %v1314 = vpack.c.b16 %v1272, %v1269
        %v1315 = vpack.c.b16 %v1273, %v1270
        %v1316 = vpack.c.b16 %v1274, %v1271
        %v1317 = vpack.c.b16 %v1278, %v1275
        %v1318 = vpack.c.b16 %v1279, %v1276
        %v1319 = vpack.c.b16 %v1280, %v1277
        %v1320 = vpack.c.b16 %v1284, %v1281
        %v1321 = vpack.c.b16 %v1285, %v1282
        %v1322 = vpack.c.b16 %v1286, %v1283
        %v1323 = vpack.c.b16 %v1290, %v1287
        %v1324 = vpack.c.b16 %v1291, %v1288
        %v1325 = vpack.c.b16 %v1292, %v1289
        %v1326 = vpack.c.b16 %v1296, %v1293
        %v1327 = vpack.c.b16 %v1297, %v1294
        %v1328 = vpack.c.b16 %v1298, %v1295
        %v1329 = vpack.c.b16 %v1302, %v1299
        %v1330 = vpack.c.b16 %v1303, %v1300
        %v1331 = vpack.c.b16 %v1304, %v1301
        %v1332 = vpack.c.b16 %v1308, %v1305
        %v1333 = vpack.c.b16 %v1309, %v1306
        %v1334 = vpack.c.b16 %v1310, %v1307
        %1359 = vmatpush.bf16.msra.mxu0 %v1332
        %1360 = vmatpush.bf16.msra.mxu0 %v1329
        %1361 = vmatpush.bf16.msra.mxu0 %v1326
        %1362 = vmatpush.bf16.msra.mxu0 %v1323
        %1363 = vmatpush.bf16.msra.mxu0 %v1320
        %1364 = vmatpush.bf16.msra.mxu0 %v1317
        %1365 = vmatpush.bf16.msra.mxu0 %v1314
        %1366 = vmatpush.bf16.msra.mxu0 %v1311
        %1367 = vmatmul.bf16.gmra.mxu0 %v1175
        %v1368 = vpop.f32.mrf.mxu0
        %v1369 = vadd.f32 %v1225, %v1368
        %v1370 = vpop.f32.mrf.mxu0
        %v1371 = vadd.f32 %v1225, %v1370
        %1372 = vmatmul.bf16.gmra.mxu0 %v1176
        %v1373 = vpop.f32.mrf.mxu0
        %v1374 = vadd.f32 %v1225, %v1373
        %v1375 = vpop.f32.mrf.mxu0
        %v1376 = vadd.f32 %v1225, %v1375
        %1377 = vmatmul.bf16.gmra.mxu0 %v1177
        %v1378 = vpop.f32.mrf.mxu0
        %v1379 = vadd.f32 %v1225, %v1378
        %v1380 = vpop.f32.mrf.mxu0
        %v1381 = vadd.f32 %v1225, %v1380
        %1382 = vmatmul.bf16.gmra.mxu0 %v1178
        %v1383 = vpop.f32.mrf.mxu0
        %v1384 = vadd.f32 %v1225, %v1383
        %v1385 = vpop.f32.mrf.mxu0
        %v1386 = vadd.f32 %v1225, %v1385
        %1387 = vmatmul.bf16.gmra.mxu0 %v1179
        %v1388 = vpop.f32.mrf.mxu0
        %v1389 = vadd.f32 %v1225, %v1388
        %v1390 = vpop.f32.mrf.mxu0
        %v1391 = vadd.f32 %v1225, %v1390
        %1392 = vmatmul.bf16.gmra.mxu0 %v1180
        %v1393 = vpop.f32.mrf.mxu0
        %v1394 = vadd.f32 %v1225, %v1393
        %v1395 = vpop.f32.mrf.mxu0
        %v1396 = vadd.f32 %v1225, %v1395
        %1397 = vmatmul.bf16.gmra.mxu0 %v1181
        %v1398 = vpop.f32.mrf.mxu0
        %v1399 = vadd.f32 %v1225, %v1398
        %v1400 = vpop.f32.mrf.mxu0
        %v1401 = vadd.f32 %v1225, %v1400
        %1402 = vmatmul.bf16.gmra.mxu0 %v1182
        %v1403 = vpop.f32.mrf.mxu0
        %v1404 = vadd.f32 %v1225, %v1403
        %v1405 = vpop.f32.mrf.mxu0
        %v1406 = vadd.f32 %v1225, %v1405
        %1407 = vmatmul.bf16.gmra.mxu0 %v1183
        %v1408 = vpop.f32.mrf.mxu0
        %v1409 = vadd.f32 %v1225, %v1408
        %v1410 = vpop.f32.mrf.mxu0
        %v1411 = vadd.f32 %v1225, %v1410
        %1412 = vmatmul.bf16.gmra.mxu0 %v1184
        %v1413 = vpop.f32.mrf.mxu0
        %v1414 = vadd.f32 %v1225, %v1413
        %v1415 = vpop.f32.mrf.mxu0
        %v1416 = vadd.f32 %v1225, %v1415
        %1417 = vmatmul.bf16.gmra.mxu0 %v1185
        %v1418 = vpop.f32.mrf.mxu0
        %v1419 = vadd.f32 %v1225, %v1418
        %v1420 = vpop.f32.mrf.mxu0
        %v1421 = vadd.f32 %v1225, %v1420
        %1422 = vmatmul.bf16.gmra.mxu0 %v1186
        %v1423 = vpop.f32.mrf.mxu0
        %v1424 = vadd.f32 %v1225, %v1423
        %v1425 = vpop.f32.mrf.mxu0
        %v1426 = vadd.f32 %v1225, %v1425
        %1427 = vmatmul.bf16.gmra.mxu0 %v1187
        %v1428 = vpop.f32.mrf.mxu0
        %v1429 = vadd.f32 %v1225, %v1428
        %v1430 = vpop.f32.mrf.mxu0
        %v1431 = vadd.f32 %v1225, %v1430
        %1432 = vmatmul.bf16.gmra.mxu0 %v1188
        %v1433 = vpop.f32.mrf.mxu0
        %v1434 = vadd.f32 %v1225, %v1433
        %v1435 = vpop.f32.mrf.mxu0
        %v1436 = vadd.f32 %v1225, %v1435
        %1437 = vmatmul.bf16.gmra.mxu0 %v1189
        %v1438 = vpop.f32.mrf.mxu0
        %v1439 = vadd.f32 %v1225, %v1438
        %v1440 = vpop.f32.mrf.mxu0
        %v1441 = vadd.f32 %v1225, %v1440
        %1442 = vmatmul.bf16.gmra.mxu0 %v1190
        %v1443 = vpop.f32.mrf.mxu0
        %v1444 = vadd.f32 %v1225, %v1443
        %v1445 = vpop.f32.mrf.mxu0
        %v1446 = vadd.f32 %v1225, %v1445
        %1447 = vdwg.mxu0
        %1448 = vmatpush.bf16.msra.mxu0 %v1333
        %1449 = vmatpush.bf16.msra.mxu0 %v1330
        %1450 = vmatpush.bf16.msra.mxu0 %v1327
        %1451 = vmatpush.bf16.msra.mxu0 %v1324
        %1452 = vmatpush.bf16.msra.mxu0 %v1321
        %1453 = vmatpush.bf16.msra.mxu0 %v1318
        %1454 = vmatpush.bf16.msra.mxu0 %v1315
        %1455 = vmatpush.bf16.msra.mxu0 %v1312
        %1456 = vmatmul.bf16.gmra.mxu0 %v1175
        %v1457 = vpop.f32.mrf.mxu0
        %v1458 = vadd.f32 %v1226, %v1457
        %v1459 = vpop.f32.mrf.mxu0
        %v1460 = vadd.f32 %v1226, %v1459
        %1461 = vmatmul.bf16.gmra.mxu0 %v1176
        %v1462 = vpop.f32.mrf.mxu0
        %v1463 = vadd.f32 %v1226, %v1462
        %v1464 = vpop.f32.mrf.mxu0
        %v1465 = vadd.f32 %v1226, %v1464
        %1466 = vmatmul.bf16.gmra.mxu0 %v1177
        %v1467 = vpop.f32.mrf.mxu0
        %v1468 = vadd.f32 %v1226, %v1467
        %v1469 = vpop.f32.mrf.mxu0
        %v1470 = vadd.f32 %v1226, %v1469
        %1471 = vmatmul.bf16.gmra.mxu0 %v1178
        %v1472 = vpop.f32.mrf.mxu0
        %v1473 = vadd.f32 %v1226, %v1472
        %v1474 = vpop.f32.mrf.mxu0
        %v1475 = vadd.f32 %v1226, %v1474
        %1476 = vmatmul.bf16.gmra.mxu0 %v1179
        %v1477 = vpop.f32.mrf.mxu0
        %v1478 = vadd.f32 %v1226, %v1477
        %v1479 = vpop.f32.mrf.mxu0
        %v1480 = vadd.f32 %v1226, %v1479
        %1481 = vmatmul.bf16.gmra.mxu0 %v1180
        %v1482 = vpop.f32.mrf.mxu0
        %v1483 = vadd.f32 %v1226, %v1482
        %v1484 = vpop.f32.mrf.mxu0
        %v1485 = vadd.f32 %v1226, %v1484
        %1486 = vmatmul.bf16.gmra.mxu0 %v1181
        %v1487 = vpop.f32.mrf.mxu0
        %v1488 = vadd.f32 %v1226, %v1487
        %v1489 = vpop.f32.mrf.mxu0
        %v1490 = vadd.f32 %v1226, %v1489
        %1491 = vmatmul.bf16.gmra.mxu0 %v1182
        %v1492 = vpop.f32.mrf.mxu0
        %v1493 = vadd.f32 %v1226, %v1492
        %v1494 = vpop.f32.mrf.mxu0
        %v1495 = vadd.f32 %v1226, %v1494
        %1496 = vmatmul.bf16.gmra.mxu0 %v1183
        %v1497 = vpop.f32.mrf.mxu0
        %v1498 = vadd.f32 %v1226, %v1497
        %v1499 = vpop.f32.mrf.mxu0
        %v1500 = vadd.f32 %v1226, %v1499
        %1501 = vmatmul.bf16.gmra.mxu0 %v1184
        %v1502 = vpop.f32.mrf.mxu0
        %v1503 = vadd.f32 %v1226, %v1502
        %v1504 = vpop.f32.mrf.mxu0
        %v1505 = vadd.f32 %v1226, %v1504
        %1506 = vmatmul.bf16.gmra.mxu0 %v1185
        %v1507 = vpop.f32.mrf.mxu0
        %v1508 = vadd.f32 %v1226, %v1507
        %v1509 = vpop.f32.mrf.mxu0
        %v1510 = vadd.f32 %v1226, %v1509
        %1511 = vmatmul.bf16.gmra.mxu0 %v1186
        %v1512 = vpop.f32.mrf.mxu0
        %v1513 = vadd.f32 %v1226, %v1512
        %v1514 = vpop.f32.mrf.mxu0
        %v1515 = vadd.f32 %v1226, %v1514
        %1516 = vmatmul.bf16.gmra.mxu0 %v1187
        %v1517 = vpop.f32.mrf.mxu0
        %v1518 = vadd.f32 %v1226, %v1517
        %v1519 = vpop.f32.mrf.mxu0
        %v1520 = vadd.f32 %v1226, %v1519
        %1521 = vmatmul.bf16.gmra.mxu0 %v1188
        %v1522 = vpop.f32.mrf.mxu0
        %v1523 = vadd.f32 %v1226, %v1522
        %v1524 = vpop.f32.mrf.mxu0
        %v1525 = vadd.f32 %v1226, %v1524
        %1526 = vmatmul.bf16.gmra.mxu0 %v1189
        %v1527 = vpop.f32.mrf.mxu0
        %v1528 = vadd.f32 %v1226, %v1527
        %v1529 = vpop.f32.mrf.mxu0
        %v1530 = vadd.f32 %v1226, %v1529
        %1531 = vmatmul.bf16.gmra.mxu0 %v1190
        %v1532 = vpop.f32.mrf.mxu0
        %v1533 = vadd.f32 %v1226, %v1532
        %v1534 = vpop.f32.mrf.mxu0
        %v1535 = vadd.f32 %v1226, %v1534
        %1536 = vdwg.mxu0
        %1537 = vmatpush.bf16.msra.mxu0 %v1334
        %1538 = vmatpush.bf16.msra.mxu0 %v1331
        %1539 = vmatpush.bf16.msra.mxu0 %v1328
        %1540 = vmatpush.bf16.msra.mxu0 %v1325
        %1541 = vmatpush.bf16.msra.mxu0 %v1322
        %1542 = vmatpush.bf16.msra.mxu0 %v1319
        %1543 = vmatpush.bf16.msra.mxu0 %v1316
        %1544 = vmatpush.bf16.msra.mxu0 %v1313
        %1545 = vmatmul.bf16.gmra.mxu0 %v1175
        %v1546 = vpop.f32.mrf.mxu0
        %v1547 = vadd.f32 %v1227, %v1546
        %v1548 = vpop.f32.mrf.mxu0
        %v1549 = vadd.f32 %v1227, %v1548
        %1550 = vmatmul.bf16.gmra.mxu0 %v1176
        %v1551 = vpop.f32.mrf.mxu0
        %v1552 = vadd.f32 %v1227, %v1551
        %v1553 = vpop.f32.mrf.mxu0
        %v1554 = vadd.f32 %v1227, %v1553
        %1555 = vmatmul.bf16.gmra.mxu0 %v1177
        %v1556 = vpop.f32.mrf.mxu0
        %v1557 = vadd.f32 %v1227, %v1556
        %v1558 = vpop.f32.mrf.mxu0
        %v1559 = vadd.f32 %v1227, %v1558
        %1560 = vmatmul.bf16.gmra.mxu0 %v1178
        %v1561 = vpop.f32.mrf.mxu0
        %v1562 = vadd.f32 %v1227, %v1561
        %v1563 = vpop.f32.mrf.mxu0
        %v1564 = vadd.f32 %v1227, %v1563
        %1565 = vmatmul.bf16.gmra.mxu0 %v1179
        %v1566 = vpop.f32.mrf.mxu0
        %v1567 = vadd.f32 %v1227, %v1566
        %v1568 = vpop.f32.mrf.mxu0
        %v1569 = vadd.f32 %v1227, %v1568
        %1570 = vmatmul.bf16.gmra.mxu0 %v1180
        %v1571 = vpop.f32.mrf.mxu0
        %v1572 = vadd.f32 %v1227, %v1571
        %v1573 = vpop.f32.mrf.mxu0
        %v1574 = vadd.f32 %v1227, %v1573
        %1575 = vmatmul.bf16.gmra.mxu0 %v1181
        %v1576 = vpop.f32.mrf.mxu0
        %v1577 = vadd.f32 %v1227, %v1576
        %v1578 = vpop.f32.mrf.mxu0
        %v1579 = vadd.f32 %v1227, %v1578
        %1580 = vmatmul.bf16.gmra.mxu0 %v1182
        %v1581 = vpop.f32.mrf.mxu0
        %v1582 = vadd.f32 %v1227, %v1581
        %v1583 = vpop.f32.mrf.mxu0
        %v1584 = vadd.f32 %v1227, %v1583
        %1585 = vmatmul.bf16.gmra.mxu0 %v1183
        %v1586 = vpop.f32.mrf.mxu0
        %v1587 = vadd.f32 %v1227, %v1586
        %v1588 = vpop.f32.mrf.mxu0
        %v1589 = vadd.f32 %v1227, %v1588
        %1590 = vmatmul.bf16.gmra.mxu0 %v1184
        %v1591 = vpop.f32.mrf.mxu0
        %v1592 = vadd.f32 %v1227, %v1591
        %v1593 = vpop.f32.mrf.mxu0
        %v1594 = vadd.f32 %v1227, %v1593
        %1595 = vmatmul.bf16.gmra.mxu0 %v1185
        %v1596 = vpop.f32.mrf.mxu0
        %v1597 = vadd.f32 %v1227, %v1596
        %v1598 = vpop.f32.mrf.mxu0
        %v1599 = vadd.f32 %v1227, %v1598
        %1600 = vmatmul.bf16.gmra.mxu0 %v1186
        %v1601 = vpop.f32.mrf.mxu0
        %v1602 = vadd.f32 %v1227, %v1601
        %v1603 = vpop.f32.mrf.mxu0
        %v1604 = vadd.f32 %v1227, %v1603
        %1605 = vmatmul.bf16.gmra.mxu0 %v1187
        %v1606 = vpop.f32.mrf.mxu0
        %v1607 = vadd.f32 %v1227, %v1606
        %v1608 = vpop.f32.mrf.mxu0
        %v1609 = vadd.f32 %v1227, %v1608
        %1610 = vmatmul.bf16.gmra.mxu0 %v1188
        %v1611 = vpop.f32.mrf.mxu0
        %v1612 = vadd.f32 %v1227, %v1611
        %v1613 = vpop.f32.mrf.mxu0
        %v1614 = vadd.f32 %v1227, %v1613
        %1615 = vmatmul.bf16.gmra.mxu0 %v1189
        %v1616 = vpop.f32.mrf.mxu0
        %v1617 = vadd.f32 %v1227, %v1616
        %v1618 = vpop.f32.mrf.mxu0
        %v1619 = vadd.f32 %v1227, %v1618
        %1620 = vmatmul.bf16.gmra.mxu0 %v1190
        %v1621 = vpop.f32.mrf.mxu0
        %v1622 = vadd.f32 %v1227, %v1621
        %v1623 = vpop.f32.mrf.mxu0
        %v1624 = vadd.f32 %v1227, %v1623
        %1625 = vdwg.mxu0
        %1626 = vst [vmem:[%s451] sm:$0xff] %v1369
        %1627 = vst [vmem:[%s451 + $0x8] sm:$0xff] %v1458
        %1628 = vst [vmem:[%s451 + $0x10] sm:$0xff] %v1547
        %1629 = vst [vmem:[%s451 + $0x18] sm:$0xff] %v1371
        %1630 = vst [vmem:[%s451 + $0x20] sm:$0xff] %v1460
        %1631 = vst [vmem:[%s451 + $0x28] sm:$0xff] %v1549
        %1632 = vst [vmem:[%s451 + $0x30] sm:$0xff] %v1374
        %1633 = vst [vmem:[%s451 + $0x38] sm:$0xff] %v1463
        %1634 = vst [vmem:[%s451 + $0x40] sm:$0xff] %v1552
        %1635 = vst [vmem:[%s451 + $0x48] sm:$0xff] %v1376
        %1636 = vst [vmem:[%s451 + $0x50] sm:$0xff] %v1465
        %1637 = vst [vmem:[%s451 + $0x58] sm:$0xff] %v1554
        %1638 = vst [vmem:[%s451 + $0x60] sm:$0xff] %v1379
        %1639 = vst [vmem:[%s451 + $0x68] sm:$0xff] %v1468
        %1640 = vst [vmem:[%s451 + $0x70] sm:$0xff] %v1557
        %1641 = vst [vmem:[%s451 + $0x78] sm:$0xff] %v1381
        %1642 = vst [vmem:[%s451 + $0x80] sm:$0xff] %v1470
        %1643 = vst [vmem:[%s451 + $0x88] sm:$0xff] %v1559
        %1644 = vst [vmem:[%s451 + $0x90] sm:$0xff] %v1384
        %1645 = vst [vmem:[%s451 + $0x98] sm:$0xff] %v1473
        %1646 = vst [vmem:[%s451 + $0xa0] sm:$0xff] %v1562
        %1647 = vst [vmem:[%s451 + $0xa8] sm:$0xff] %v1386
        %1648 = vst [vmem:[%s451 + $0xb0] sm:$0xff] %v1475
        %1649 = vst [vmem:[%s451 + $0xb8] sm:$0xff] %v1564
        %1650 = vst [vmem:[%s451 + $0xc0] sm:$0xff] %v1389
        %1651 = vst [vmem:[%s451 + $0xc8] sm:$0xff] %v1478
        %1652 = vst [vmem:[%s451 + $0xd0] sm:$0xff] %v1567
        %1653 = vst [vmem:[%s451 + $0xd8] sm:$0xff] %v1391
        %1654 = vst [vmem:[%s451 + $0xe0] sm:$0xff] %v1480
        %1655 = vst [vmem:[%s451 + $0xe8] sm:$0xff] %v1569
        %1656 = vst [vmem:[%s451 + $0xf0] sm:$0xff] %v1394
        %1657 = vst [vmem:[%s451 + $0xf8] sm:$0xff] %v1483
        %1658 = vst [vmem:[%s451 + $0x100] sm:$0xff] %v1572
        %1659 = vst [vmem:[%s451 + $0x108] sm:$0xff] %v1396
        %1660 = vst [vmem:[%s451 + $0x110] sm:$0xff] %v1485
        %1661 = vst [vmem:[%s451 + $0x118] sm:$0xff] %v1574
        %1662 = vst [vmem:[%s451 + $0x120] sm:$0xff] %v1399
        %1663 = vst [vmem:[%s451 + $0x128] sm:$0xff] %v1488
        %1664 = vst [vmem:[%s451 + $0x130] sm:$0xff] %v1577
        %1665 = vst [vmem:[%s451 + $0x138] sm:$0xff] %v1401
        %1666 = vst [vmem:[%s451 + $0x140] sm:$0xff] %v1490
        %1667 = vst [vmem:[%s451 + $0x148] sm:$0xff] %v1579
        %1668 = vst [vmem:[%s451 + $0x150] sm:$0xff] %v1404
        %1669 = vst [vmem:[%s451 + $0x158] sm:$0xff] %v1493
        %1670 = vst [vmem:[%s451 + $0x160] sm:$0xff] %v1582
        %1671 = vst [vmem:[%s451 + $0x168] sm:$0xff] %v1406
        %1672 = vst [vmem:[%s451 + $0x170] sm:$0xff] %v1495
        %1673 = vst [vmem:[%s451 + $0x178] sm:$0xff] %v1584
        %1674 = vst [vmem:[%s451 + $0x180] sm:$0xff] %v1409
        %1675 = vst [vmem:[%s451 + $0x188] sm:$0xff] %v1498
        %1676 = vst [vmem:[%s451 + $0x190] sm:$0xff] %v1587
        %1677 = vst [vmem:[%s451 + $0x198] sm:$0xff] %v1411
        %1678 = vst [vmem:[%s451 + $0x1a0] sm:$0xff] %v1500
        %1679 = vst [vmem:[%s451 + $0x1a8] sm:$0xff] %v1589
        %1680 = vst [vmem:[%s451 + $0x1b0] sm:$0xff] %v1414
        %1681 = vst [vmem:[%s451 + $0x1b8] sm:$0xff] %v1503
        %1682 = vst [vmem:[%s451 + $0x1c0] sm:$0xff] %v1592
        %1683 = vst [vmem:[%s451 + $0x1c8] sm:$0xff] %v1416
        %1684 = vst [vmem:[%s451 + $0x1d0] sm:$0xff] %v1505
        %1685 = vst [vmem:[%s451 + $0x1d8] sm:$0xff] %v1594
        %1686 = vst [vmem:[%s451 + $0x1e0] sm:$0xff] %v1419
        %1687 = vst [vmem:[%s451 + $0x1e8] sm:$0xff] %v1508
        %1688 = vst [vmem:[%s451 + $0x1f0] sm:$0xff] %v1597
        %1689 = vst [vmem:[%s451 + $0x1f8] sm:$0xff] %v1421
        %1690 = vst [vmem:[%s451 + $0x200] sm:$0xff] %v1510
        %1691 = vst [vmem:[%s451 + $0x208] sm:$0xff] %v1599
        %1692 = vst [vmem:[%s451 + $0x210] sm:$0xff] %v1424
        %1693 = vst [vmem:[%s451 + $0x218] sm:$0xff] %v1513
        %1694 = vst [vmem:[%s451 + $0x220] sm:$0xff] %v1602
        %1695 = vst [vmem:[%s451 + $0x228] sm:$0xff] %v1426
        %1696 = vst [vmem:[%s451 + $0x230] sm:$0xff] %v1515
        %1697 = vst [vmem:[%s451 + $0x238] sm:$0xff] %v1604
        %1698 = vst [vmem:[%s451 + $0x240] sm:$0xff] %v1429
        %1699 = vst [vmem:[%s451 + $0x248] sm:$0xff] %v1518
        %1700 = vst [vmem:[%s451 + $0x250] sm:$0xff] %v1607
        %1701 = vst [vmem:[%s451 + $0x258] sm:$0xff] %v1431
        %1702 = vst [vmem:[%s451 + $0x260] sm:$0xff] %v1520
        %1703 = vst [vmem:[%s451 + $0x268] sm:$0xff] %v1609
        %1704 = vst [vmem:[%s451 + $0x270] sm:$0xff] %v1434
        %1705 = vst [vmem:[%s451 + $0x278] sm:$0xff] %v1523
        %1706 = vst [vmem:[%s451 + $0x280] sm:$0xff] %v1612
        %1707 = vst [vmem:[%s451 + $0x288] sm:$0xff] %v1436
        %1708 = vst [vmem:[%s451 + $0x290] sm:$0xff] %v1525
        %1709 = vst [vmem:[%s451 + $0x298] sm:$0xff] %v1614
        %1710 = vst [vmem:[%s451 + $0x2a0] sm:$0xff] %v1439
        %1711 = vst [vmem:[%s451 + $0x2a8] sm:$0xff] %v1528
        %1712 = vst [vmem:[%s451 + $0x2b0] sm:$0xff] %v1617
        %1713 = vst [vmem:[%s451 + $0x2b8] sm:$0xff] %v1441
        %1714 = vst [vmem:[%s451 + $0x2c0] sm:$0xff] %v1530
        %1715 = vst [vmem:[%s451 + $0x2c8] sm:$0xff] %v1619
        %1716 = vst [vmem:[%s451 + $0x2d0] sm:$0xff] %v1444
        %1717 = vst [vmem:[%s451 + $0x2d8] sm:$0xff] %v1533
        %1718 = vst [vmem:[%s451 + $0x2e0] sm:$0xff] %v1622
        %1719 = vst [vmem:[%s451 + $0x2e8] sm:$0xff] %v1446
        %1720 = vst [vmem:[%s451 + $0x2f0] sm:$0xff] %v1535
        %1721 = vst [vmem:[%s451 + $0x2f8] sm:$0xff] %v1624
        %s1722 = sand.u32 %s230, 1
        %s1723 = scalar_lea.sflag [#allocation4], %s1722
        %s1724 = sand.u32 %s230, 1
        %s1725 = smul.addr %s1724, 768
        %s1726 = scalar_lea.vmem [#allocation16], %s1725
        // Predicated region
        $region89: #{tpu_custom_call.1} parent=55 // pred_check
          %p1727 = pneg %p240
        $region90: #{tpu_custom_call.1} parent=55 // pred_check_branch
          %1729 = sbr.rel (%p1727) target = $region92
        $region91: #{tpu_custom_call.1} parent=55 // pred_region
          %s1730 = smul.u32 32, %s28
          %1732 = vsyncadd %s1723, 0
          %s1733 = smul.addr %s1730, 3
          %s1734 = smul.addr %s1733, 8
          %s1735 = scalar_lea.hbm %s9, %s1734
          %s1736 = sshll.u32 %s1726, 4
          %s1737 = int_to_ptr.vmem [resolvable:$true] %s1736
          %s1738 = sshll.u32 %s1735, 4
          %s1739 = int_to_ptr.hbm [resolvable:$true] %s1738
          %1744 = dma.vmem_to_hbm [thread:$0]  %s1737, 12288, %s1739, %s1723, 384, 384, 24
        $region92: #{tpu_custom_call.1} parent=55 // pred_fallthru
          _
      $region56: #{tpu_custom_call.1} parent=5 // pred_fallthru
        _
      %p1745 = scmp.le.s32.totalorder 2, %s23
      // Predicated region
      $region93: #{tpu_custom_call.1} parent=5 // pred_check
        %p1746 = pneg %p1745
      $region94: #{tpu_custom_call.1} parent=5 // pred_check_branch
        %1748 = sbr.rel (%p1746) target = $region96
      $region95: #{tpu_custom_call.1} parent=5 // pred_region
        %s1749 = ssub.s32 %s23, 2
        // Predicated region
        $region97: #{tpu_custom_call.1} parent=95 // pred_check
          %p1750 = pneg %p246
        $region98: #{tpu_custom_call.1} parent=95 // pred_check_branch
          %1752 = sbr.rel (%p1750) target = $region100
        $region99: #{tpu_custom_call.1} parent=95 // pred_region
          %s1753 = sand.u32 %s231, 1
          %s1754 = scalar_lea.sflag [#allocation4], %s1753
          %s1755 = sand.u32 %s231, 1
          %s1756 = smul.addr %s1755, 768
          %s1757 = scalar_lea.vmem [#allocation16], %s1756
          %1759 = dma.done %s1754, 12288
        $region100: #{tpu_custom_call.1} parent=95 // pred_fallthru
          _
      $region96: #{tpu_custom_call.1} parent=5 // pred_fallthru
        _
    $region6: #{tpu_custom_call.1} parent=1 // loop_footer
      %s27 = sadd.s32 1, %s23
    $region7: #{tpu_custom_call.1} parent=1 // loop_footer_branch
      %22 = sbr.rel target = $region3
    $region8: #{tpu_custom_call.1} parent=1 // loop_exit
      _
    %1760 = vsyncpa [#allocation3], 1
    %s1761 = scalar_lea.sflag [#allocation3], 1
    %1762 = vsyncpa %s1761, 1
    %1763 = vsyncpa [#allocation6], 1
    %1764 = vsyncpa [#allocation9], 1
    %1765 = vsyncpa [#allocation12], 1
    %1766 = vsyncpa [#allocation15], 1
    %1767 = vsyncpa [#allocation4], 1
    %s1768 = scalar_lea.sflag [#allocation4], 1
    %1769 = vsyncpa %s1768, 1

</llo_original>
